<compile_context>
chip_gen: v7x
topology: tpu7x:2x2x1
jax: 0.10.0
libtpu: 0.0.40
codegen_flags: <defaults>
</compile_context>

<pallas_src>
import functools

import jax
import jax.numpy as jnp
from jax import lax
from jax.experimental import pallas as pl
from jax.experimental.pallas import tpu as pltpu

_SUBLANE = 8    # f32 sublane granule
_LANE = 128     # lane granule


def _round_up(x, m):
    return (x + m - 1) // m * m


def _pan_block_kernel(hr_ref, pan_ref, mask_ref, w1p_ref, w2p_ref, w1r_ref,
                      w2r_ref, w1x_ref, w2x_ref, o_ref, *, K, W):
    """Fused PANBlock forward for one group of images.

    Activations are (C_pad, L) f32 with the flattened (image, pixel) axis on
    the lane dimension.  Weight refs are (C_out_pad, K*K*C_in_pad) im2col
    matrices in the MXU feed dtype.  mask_ref holds one precomputed 0/1 row
    per kernel tap (padded to a sublane multiple); the masks already account
    for image boundaries, so taps never leak between images packed on the
    lane axis (padded lanes/channels stay exactly zero end-to-end).
    """
    p = K // 2
    L = hr_ref.shape[-1]
    mxu_dtype = w1p_ref.dtype

    # Lane shift per tap, tap-major order (matches the weight-matrix columns).
    shifts = [(kh - p) * W + (kw - p) for kh in range(K) for kw in range(K)]

    masks_1l = mask_ref[...]                       # (taps_pad, L); extra rows are 0

    # Hoisted broadcast of every tap mask to (c_in, L).  JAX does not CSE
    # broadcast_in_dim, so build each exactly once and reuse in all six convs.
    bcast_cache = {}

    def tap_masks(c_in):
        if c_in not in bcast_cache:
            bcast_cache[c_in] = [
                jnp.broadcast_to(masks_1l[t:t + 1, :], (c_in, L))
                for t in range(len(shifts))]
        return bcast_cache[c_in]

    def conv(x, w_ref):
        # x: (c_in_pad, L) f32 -> (c_out_pad, L) f32; KxK 'same' conv, zero pad.
        c_in = x.shape[0]
        masks = tap_masks(c_in)
        pieces = []
        for t, d in enumerate(shifts):
            if d == 0:
                pieces.append(x.astype(mxu_dtype))
            else:
                shifted = pltpu.roll(x, shift=(-d) % L, axis=1)
                pieces.append((shifted * masks[t]).astype(mxu_dtype))
        # TODO(synk): for production H*W, replace the concat-then-one-matmul
        # im2col with K*K per-tap accumulating matmuls into an f32 scratch
        # (removes the 9x patches buffer; matters for v5e's single vst slot
        # and v7x's 64 MiB VMEM).  At these tiny tiles the single matmul wins.
        patches = jnp.concatenate(pieces, axis=0)          # (K*K*c_in, L)
        return jnp.dot(w_ref[...], patches,
                       preferred_element_type=jnp.float32)  # f32 accumulate

    def basic_unit(x, w1_ref, w2_ref):
        return conv(jnp.maximum(conv(x, w1_ref), 0.0), w2_ref)

    hr = hr_ref[...].astype(jnp.float32)     # (C_ms_pad, L)
    pan = pan_ref[...].astype(jnp.float32)   # (C_pan_pad, L)

    pan_hat = basic_unit(hr, w1p_ref, w2p_ref)
    hr_res = basic_unit(pan - pan_hat, w1r_ref, w2r_ref)
    hr_out = basic_unit(hr + hr_res, w1x_ref, w2x_ref)

    o_ref[...] = hr_out.astype(o_ref.dtype)


def _weight_to_mat(w_oihw, c_out_pad, c_in_pad, dtype):
    """PyTorch Conv2d weight (O, I, kh, kw) -> (O_pad, K*K*I_pad) im2col matrix.

    Column ordering is tap-major / input-channel-minor, matching the order in
    which the kernel stacks the shifted copies.  Padding rows/cols are zero.
    """
    O, I, Kh, Kw = w_oihw.shape
    w = jnp.transpose(w_oihw, (2, 3, 0, 1))                       # (K, K, O, I)
    w = jnp.pad(w, ((0, 0), (0, 0), (0, c_out_pad - O), (0, c_in_pad - I)))
    w = jnp.transpose(w, (2, 0, 1, 3))                            # (O_p, K, K, I_p)
    return w.reshape(c_out_pad, Kh * Kw * c_in_pad).astype(dtype)


def _tap_masks(K, H, W, NB, Lp):
    """(taps_pad, Lp) 0/1 f32 validity mask per tap over the packed lane axis.

    row is computed modulo H and the image index is checked, so taps that
    would cross an image boundary (or land in lane padding) are zeroed.
    """
    p = K // 2
    HW = H * W
    pos = jnp.arange(Lp, dtype=jnp.int32)
    img = pos // HW
    row = (pos // W) % H
    col = pos % W
    rows = []
    for kh in range(K):
        dh = kh - p
        for kw in range(K):
            dw = kw - p
            rows.append((img < NB)
                        & (row + dh >= 0) & (row + dh < H)
                        & (col + dw >= 0) & (col + dw < W))
    m = jnp.stack(rows).astype(jnp.float32)                       # (K*K, Lp)
    taps_pad = _round_up(K * K, _SUBLANE)
    return jnp.pad(m, ((0, taps_pad - K * K), (0, 0)))


def pan_block_forward(HR_nchw, PAN_nchw, params, kernel_size, *,
                      mxu_dtype=jnp.bfloat16, grid_steps=None):
    """PANBlock.forward; inputs/outputs follow the PyTorch NCHW convention.

    params[name] = (conv1_weight, conv2_weight) in OIHW (PyTorch) layout.
    mxu_dtype: dtype fed to the MXU (weights + im2col patches); accumulation
    is always f32.  grid_steps: number of grid iterations; default keeps >= 2
    (both v7x TensorCores), single-TC chips may pass 1 to widen the RHS fully.
    """
    N, C_ms, H, W = HR_nchw.shape
    _, C_pan, _, _ = PAN_nchw.shape
    K = kernel_size
    HW = H * W
    n_feat = params["get_PAN"][0].shape[0]

    cms = _round_up(C_ms, _SUBLANE)
    cpan = _round_up(C_pan, _SUBLANE)
    cft = _round_up(n_feat, _SUBLANE)

    if grid_steps is None:
        grid_steps = 2 if N >= 2 else 1
    G = grid_steps
    NB = -(-N // G)                     # images per grid step (batch is padded)
    Lp = _round_up(NB * HW, _LANE)      # lane-padded RHS width per step

    # im2col weight matrices, zero-padded channels, pre-cast to the MXU dtype.
    w1p = _weight_to_mat(params["get_PAN"][0], cft, cms, mxu_dtype)
    w2p = _weight_to_mat(params["get_PAN"][1], cpan, cft, mxu_dtype)
    w1r = _weight_to_mat(params["get_HR_residual"][0], cft, cpan, mxu_dtype)
    w2r = _weight_to_mat(params["get_HR_residual"][1], cms, cft, mxu_dtype)
    w1x = _weight_to_mat(params["prox"][0], cft, cms, mxu_dtype)
    w2x = _weight_to_mat(params["prox"][1], cms, cft, mxu_dtype)

    masks = _tap_masks(K, H, W, NB, Lp)                 # (taps_pad, Lp)

    def pack(x, c_pad):
        # NCHW -> (G, c_pad, Lp): NB images flattened onto the lane axis.
        n, c = x.shape[0], x.shape[1]
        x = x.reshape(n, c, HW)
        x = jnp.pad(x, ((0, G * NB - n), (0, c_pad - c), (0, 0)))
        x = x.reshape(G, NB, c_pad, HW).transpose(0, 2, 1, 3)
        x = x.reshape(G, c_pad, NB * HW)
        return jnp.pad(x, ((0, 0), (0, 0), (0, Lp - NB * HW)))

    hr = pack(HR_nchw, cms)        # (G, cms, Lp)
    pan = pack(PAN_nchw, cpan)     # (G, cpan, Lp)

    kernel = functools.partial(_pan_block_kernel, K=K, W=W)

    def act_spec(c_pad):
        return pl.BlockSpec((pl.Squeezed(), c_pad, Lp), lambda g: (g, 0, 0))

    def const_spec(a):
        # Constant-index blocks (weights / masks); index never changes.
        return pl.BlockSpec(a.shape, lambda g: (0, 0))

    # Advisory cost estimate so XLA schedules neighbors around this call well.
    wbytes = jnp.dtype(mxu_dtype).itemsize
    flops = int(2 * K * K * HW * N
                * (n_feat * C_ms + C_pan * n_feat + n_feat * C_pan
                   + C_ms * n_feat + n_feat * C_ms + C_ms * n_feat))
    bytes_accessed = int(
        (HR_nchw.size + PAN_nchw.size + N * C_ms * HW) * HR_nchw.dtype.itemsize
        + (w1p.size + w2p.size + w1r.size + w2r.size + w1x.size + w2x.size)
        * wbytes
        + masks.size * 4)

    # TODO(synk): for production image sizes add an H-tile grid axis with a
    # p-row halo; size the tile against v7x first (im2col patches +
    # double-buffered blocks <= ~24-28 MiB of its 64 MiB VMEM, raise
    # vmem_limit_bytes via pltpu.CompilerParams) and keep >= 2 grid points.
    out = pl.pallas_call(
        kernel,
        out_shape=jax.ShapeDtypeStruct((G, cms, Lp), HR_nchw.dtype),
        grid_spec=pltpu.PrefetchScalarGridSpec(
            num_scalar_prefetch=0,
            grid=(G,),
            in_specs=[
                act_spec(cms), act_spec(cpan), const_spec(masks),
                const_spec(w1p), const_spec(w2p), const_spec(w1r),
                const_spec(w2r), const_spec(w1x), const_spec(w2x),
            ],
            out_specs=act_spec(cms),
        ),
        compiler_params=pltpu.CompilerParams(
            dimension_semantics=("parallel",)),
        cost_estimate=pl.CostEstimate(flops=flops, transcendentals=0,
                                      bytes_accessed=bytes_accessed),
    )(hr, pan, masks, w1p, w2p, w1r, w2r, w1x, w2x)

    # (G, cms, Lp) -> (N, C_ms, H, W): strip lane/channel/batch padding.
    out = out[:, :, :NB * HW].reshape(G, cms, NB, HW).transpose(0, 2, 1, 3)
    out = out.reshape(G * NB, cms, HW)[:N, :C_ms]
    return out.reshape(N, C_ms, H, W)


# ---------------- pure-JAX reference (for correctness check) ----------------
def _conv_ref(x, w_oihw, p):
    return lax.conv_general_dilated(
        x, w_oihw, window_strides=(1, 1), padding=[(p, p), (p, p)],
        dimension_numbers=("NCHW", "OIHW", "NCHW"))


def _basic_unit_ref(x, w1, w2, K):
    p = K // 2
    return _conv_ref(jnp.maximum(_conv_ref(x, w1, p), 0.0), w2, p)


def _pan_block_ref(HR, PAN, params, K):
    PAN_hat = _basic_unit_ref(HR, *params["get_PAN"], K)
    HR_res = _basic_unit_ref(PAN - PAN_hat, *params["get_HR_residual"], K)
    return _basic_unit_ref(HR + HR_res, *params["prox"], K)


if __name__ == "__main__":
    # Small shapes consistent with the module (pansharpening setting).
    N, ms_channels, pan_channels, n_feat = 2, 4, 1, 8
    H = W = 16
    K = 3

    key = jax.random.PRNGKey(0)
    keys = jax.random.split(key, 8)

    def winit(k, shape):
        return (0.1 * jax.random.normal(k, shape)).astype(jnp.float32)

    # PyTorch Conv2d weight layout: (out_channels, in_channels, kh, kw).
    params = {
        "get_PAN": (winit(keys[0], (n_feat, ms_channels, K, K)),
                    winit(keys[1], (pan_channels, n_feat, K, K))),
        "get_HR_residual": (winit(keys[2], (n_feat, pan_channels, K, K)),
                            winit(keys[3], (ms_channels, n_feat, K, K))),
        "prox": (winit(keys[4], (n_feat, ms_channels, K, K)),
                 winit(keys[5], (ms_channels, n_feat, K, K))),
    }

    HR = jax.random.normal(keys[6], (N, ms_channels, H, W), jnp.float32)
    PAN = jax.random.normal(keys[7], (N, pan_channels, H, W), jnp.float32)

    ref = jax.block_until_ready(_pan_block_ref(HR, PAN, params, K))

    # Exact path: f32 MXU feed must match the XLA conv reference tightly.
    out_f32 = jax.block_until_ready(
        pan_block_forward(HR, PAN, params, K, mxu_dtype=jnp.float32))
    assert out_f32.shape == (N, ms_channels, H, W)
    assert jnp.allclose(out_f32, ref, rtol=1e-4, atol=1e-4), "f32 mismatch"

    # Perf path: bf16 MXU feed (v6e/v7x recommendation), f32 accumulation;
    # verified to a bf16-appropriate tolerance against the f32 reference.
    out_bf16 = jax.block_until_ready(
        pan_block_forward(HR, PAN, params, K, mxu_dtype=jnp.bfloat16))
    assert out_bf16.shape == (N, ms_channels, H, W)
    assert jnp.allclose(out_bf16, ref, rtol=5e-2, atol=5e-2), "bf16 mismatch"

    print("KERNEL_OK")
</pallas_src>

<mosaic_0001>
module attributes {stable_mosaic.version = 11 : i64} {
  func.func @_pan_block_kernel(%arg0: i32, %arg1: memref<1x8x256xf32, #tpu.memory_space<vmem>>, %arg2: memref<1x8x256xf32, #tpu.memory_space<vmem>>, %arg3: memref<16x256xf32, #tpu.memory_space<vmem>>, %arg4: memref<8x72xf32, #tpu.memory_space<vmem>>, %arg5: memref<8x72xf32, #tpu.memory_space<vmem>>, %arg6: memref<8x72xf32, #tpu.memory_space<vmem>>, %arg7: memref<8x72xf32, #tpu.memory_space<vmem>>, %arg8: memref<8x72xf32, #tpu.memory_space<vmem>>, %arg9: memref<8x72xf32, #tpu.memory_space<vmem>>, %arg10: memref<1x8x256xf32, #tpu.memory_space<vmem>>) attributes {dimension_semantics = [#tpu.dimension_semantics<parallel>], iteration_bounds = array<i64: 2>, scalar_prefetch = 0 : i64, scratch_operands = 0 : i64, tpu.core_type = #tpu.core_type<tc>, window_params = [{transform_indices = @transform_0, window_bounds = array<i64: 1, 8, 256>}, {transform_indices = @transform_1, window_bounds = array<i64: 1, 8, 256>}, {pipeline_mode = #tpu.pipeline_mode<synchronous>, transform_indices = @transform_2, window_bounds = array<i64: 16, 256>}, {pipeline_mode = #tpu.pipeline_mode<synchronous>, transform_indices = @transform_3, window_bounds = array<i64: 8, 72>}, {pipeline_mode = #tpu.pipeline_mode<synchronous>, transform_indices = @transform_4, window_bounds = array<i64: 8, 72>}, {pipeline_mode = #tpu.pipeline_mode<synchronous>, transform_indices = @transform_5, window_bounds = array<i64: 8, 72>}, {pipeline_mode = #tpu.pipeline_mode<synchronous>, transform_indices = @transform_6, window_bounds = array<i64: 8, 72>}, {pipeline_mode = #tpu.pipeline_mode<synchronous>, transform_indices = @transform_7, window_bounds = array<i64: 8, 72>}, {pipeline_mode = #tpu.pipeline_mode<synchronous>, transform_indices = @transform_8, window_bounds = array<i64: 8, 72>}, {transform_indices = @transform_9, window_bounds = array<i64: 1, 8, 256>}]} {
    %c0 = arith.constant 0 : index
    %c0_0 = arith.constant 0 : index
    %0 = vector.load %arg3[%c0, %c0_0] : memref<16x256xf32, #tpu.memory_space<vmem>>, vector<16x256xf32>
    %c0_1 = arith.constant 0 : index
    %c0_2 = arith.constant 0 : index
    %c0_3 = arith.constant 0 : index
    %1 = vector.load %arg1[%c0_1, %c0_2, %c0_3] : memref<1x8x256xf32, #tpu.memory_space<vmem>>, vector<1x8x256xf32>
    %2 = vector.shape_cast %1 : vector<1x8x256xf32> to vector<8x256xf32>
    %c0_4 = arith.constant 0 : index
    %c0_5 = arith.constant 0 : index
    %c0_6 = arith.constant 0 : index
    %3 = vector.load %arg2[%c0_4, %c0_5, %c0_6] : memref<1x8x256xf32, #tpu.memory_space<vmem>>, vector<1x8x256xf32>
    %4 = vector.shape_cast %3 : vector<1x8x256xf32> to vector<8x256xf32>
    %5 = vector.extract_strided_slice %0 {offsets = [0, 0], sizes = [1, 256], strides = [1, 1]} : vector<16x256xf32> to vector<1x256xf32>
    %6 = vector.shape_cast %5 : vector<1x256xf32> to vector<1x256xf32>
    %7 = vector.broadcast %6 : vector<1x256xf32> to vector<8x256xf32>
    %8 = vector.extract_strided_slice %0 {offsets = [1, 0], sizes = [1, 256], strides = [1, 1]} : vector<16x256xf32> to vector<1x256xf32>
    %9 = vector.shape_cast %8 : vector<1x256xf32> to vector<1x256xf32>
    %10 = vector.broadcast %9 : vector<1x256xf32> to vector<8x256xf32>
    %11 = vector.extract_strided_slice %0 {offsets = [2, 0], sizes = [1, 256], strides = [1, 1]} : vector<16x256xf32> to vector<1x256xf32>
    %12 = vector.shape_cast %11 : vector<1x256xf32> to vector<1x256xf32>
    %13 = vector.broadcast %12 : vector<1x256xf32> to vector<8x256xf32>
    %14 = vector.extract_strided_slice %0 {offsets = [3, 0], sizes = [1, 256], strides = [1, 1]} : vector<16x256xf32> to vector<1x256xf32>
    %15 = vector.shape_cast %14 : vector<1x256xf32> to vector<1x256xf32>
    %16 = vector.broadcast %15 : vector<1x256xf32> to vector<8x256xf32>
    %17 = vector.extract_strided_slice %0 {offsets = [5, 0], sizes = [1, 256], strides = [1, 1]} : vector<16x256xf32> to vector<1x256xf32>
    %18 = vector.shape_cast %17 : vector<1x256xf32> to vector<1x256xf32>
    %19 = vector.broadcast %18 : vector<1x256xf32> to vector<8x256xf32>
    %20 = vector.extract_strided_slice %0 {offsets = [6, 0], sizes = [1, 256], strides = [1, 1]} : vector<16x256xf32> to vector<1x256xf32>
    %21 = vector.shape_cast %20 : vector<1x256xf32> to vector<1x256xf32>
    %22 = vector.broadcast %21 : vector<1x256xf32> to vector<8x256xf32>
    %23 = vector.extract_strided_slice %0 {offsets = [7, 0], sizes = [1, 256], strides = [1, 1]} : vector<16x256xf32> to vector<1x256xf32>
    %24 = vector.shape_cast %23 : vector<1x256xf32> to vector<1x256xf32>
    %25 = vector.broadcast %24 : vector<1x256xf32> to vector<8x256xf32>
    %26 = vector.extract_strided_slice %0 {offsets = [8, 0], sizes = [1, 256], strides = [1, 1]} : vector<16x256xf32> to vector<1x256xf32>
    %27 = vector.shape_cast %26 : vector<1x256xf32> to vector<1x256xf32>
    %28 = vector.broadcast %27 : vector<1x256xf32> to vector<8x256xf32>
    %c17_i32 = arith.constant 17 : i32
    %29 = tpu.dynamic_rotate %2 by %c17_i32 dim 1 : vector<8x256xf32>, i32 -> vector<8x256xf32>
    %30 = arith.mulf %29, %7 : vector<8x256xf32>
    %c16_i32 = arith.constant 16 : i32
    %31 = tpu.dynamic_rotate %2 by %c16_i32 dim 1 : vector<8x256xf32>, i32 -> vector<8x256xf32>
    %32 = arith.mulf %31, %10 : vector<8x256xf32>
    %c15_i32 = arith.constant 15 : i32
    %33 = tpu.dynamic_rotate %2 by %c15_i32 dim 1 : vector<8x256xf32>, i32 -> vector<8x256xf32>
    %34 = arith.mulf %33, %13 : vector<8x256xf32>
    %c1_i32 = arith.constant 1 : i32
    %35 = tpu.dynamic_rotate %2 by %c1_i32 dim 1 : vector<8x256xf32>, i32 -> vector<8x256xf32>
    %36 = arith.mulf %35, %16 : vector<8x256xf32>
    %c255_i32 = arith.constant 255 : i32
    %37 = tpu.dynamic_rotate %2 by %c255_i32 dim 1 : vector<8x256xf32>, i32 -> vector<8x256xf32>
    %38 = arith.mulf %37, %19 : vector<8x256xf32>
    %c241_i32 = arith.constant 241 : i32
    %39 = tpu.dynamic_rotate %2 by %c241_i32 dim 1 : vector<8x256xf32>, i32 -> vector<8x256xf32>
    %40 = arith.mulf %39, %22 : vector<8x256xf32>
    %c240_i32 = arith.constant 240 : i32
    %41 = tpu.dynamic_rotate %2 by %c240_i32 dim 1 : vector<8x256xf32>, i32 -> vector<8x256xf32>
    %42 = arith.mulf %41, %25 : vector<8x256xf32>
    %c239_i32 = arith.constant 239 : i32
    %43 = tpu.dynamic_rotate %2 by %c239_i32 dim 1 : vector<8x256xf32>, i32 -> vector<8x256xf32>
    %44 = arith.mulf %43, %28 : vector<8x256xf32>
    %45 = tpu.concatenate %30, %32, %34, %36, %2, %38, %40, %42, %44 in 0 : vector<8x256xf32>, vector<8x256xf32>, vector<8x256xf32>, vector<8x256xf32>, vector<8x256xf32>, vector<8x256xf32>, vector<8x256xf32>, vector<8x256xf32>, vector<8x256xf32> -> vector<72x256xf32>
    %c0_7 = arith.constant 0 : index
    %c0_8 = arith.constant 0 : index
    %46 = vector.load %arg4[%c0_7, %c0_8] : memref<8x72xf32, #tpu.memory_space<vmem>>, vector<8x72xf32>
    %cst = arith.constant dense<0.000000e+00> : vector<8x256xf32>
    %47 = tpu.matmul %46, %45, %cst {dimension_numbers = #tpu.dot_dimension_numbers<[1], [0], [0], [1], [0, 0, 1, 1], [], []>} : vector<8x72xf32>, vector<72x256xf32>, vector<8x256xf32> -> vector<8x256xf32>
    %cst_9 = arith.constant 0.000000e+00 : f32
    %48 = vector.broadcast %cst_9 : f32 to vector<8x256xf32>
    %49 = arith.maximumf %47, %48 : vector<8x256xf32>
    %c17_i32_10 = arith.constant 17 : i32
    %50 = tpu.dynamic_rotate %49 by %c17_i32_10 dim 1 : vector<8x256xf32>, i32 -> vector<8x256xf32>
    %51 = arith.mulf %50, %7 : vector<8x256xf32>
    %c16_i32_11 = arith.constant 16 : i32
    %52 = tpu.dynamic_rotate %49 by %c16_i32_11 dim 1 : vector<8x256xf32>, i32 -> vector<8x256xf32>
    %53 = arith.mulf %52, %10 : vector<8x256xf32>
    %c15_i32_12 = arith.constant 15 : i32
    %54 = tpu.dynamic_rotate %49 by %c15_i32_12 dim 1 : vector<8x256xf32>, i32 -> vector<8x256xf32>
    %55 = arith.mulf %54, %13 : vector<8x256xf32>
    %c1_i32_13 = arith.constant 1 : i32
    %56 = tpu.dynamic_rotate %49 by %c1_i32_13 dim 1 : vector<8x256xf32>, i32 -> vector<8x256xf32>
    %57 = arith.mulf %56, %16 : vector<8x256xf32>
    %c255_i32_14 = arith.constant 255 : i32
    %58 = tpu.dynamic_rotate %49 by %c255_i32_14 dim 1 : vector<8x256xf32>, i32 -> vector<8x256xf32>
    %59 = arith.mulf %58, %19 : vector<8x256xf32>
    %c241_i32_15 = arith.constant 241 : i32
    %60 = tpu.dynamic_rotate %49 by %c241_i32_15 dim 1 : vector<8x256xf32>, i32 -> vector<8x256xf32>
    %61 = arith.mulf %60, %22 : vector<8x256xf32>
    %c240_i32_16 = arith.constant 240 : i32
    %62 = tpu.dynamic_rotate %49 by %c240_i32_16 dim 1 : vector<8x256xf32>, i32 -> vector<8x256xf32>
    %63 = arith.mulf %62, %25 : vector<8x256xf32>
    %c239_i32_17 = arith.constant 239 : i32
    %64 = tpu.dynamic_rotate %49 by %c239_i32_17 dim 1 : vector<8x256xf32>, i32 -> vector<8x256xf32>
    %65 = arith.mulf %64, %28 : vector<8x256xf32>
    %66 = tpu.concatenate %51, %53, %55, %57, %49, %59, %61, %63, %65 in 0 : vector<8x256xf32>, vector<8x256xf32>, vector<8x256xf32>, vector<8x256xf32>, vector<8x256xf32>, vector<8x256xf32>, vector<8x256xf32>, vector<8x256xf32>, vector<8x256xf32> -> vector<72x256xf32>
    %c0_18 = arith.constant 0 : index
    %c0_19 = arith.constant 0 : index
    %67 = vector.load %arg5[%c0_18, %c0_19] : memref<8x72xf32, #tpu.memory_space<vmem>>, vector<8x72xf32>
    %cst_20 = arith.constant dense<0.000000e+00> : vector<8x256xf32>
    %68 = tpu.matmul %67, %66, %cst_20 {dimension_numbers = #tpu.dot_dimension_numbers<[1], [0], [0], [1], [0, 0, 1, 1], [], []>} : vector<8x72xf32>, vector<72x256xf32>, vector<8x256xf32> -> vector<8x256xf32>
    %69 = arith.subf %4, %68 : vector<8x256xf32>
    %c17_i32_21 = arith.constant 17 : i32
    %70 = tpu.dynamic_rotate %69 by %c17_i32_21 dim 1 : vector<8x256xf32>, i32 -> vector<8x256xf32>
    %71 = arith.mulf %70, %7 : vector<8x256xf32>
    %c16_i32_22 = arith.constant 16 : i32
    %72 = tpu.dynamic_rotate %69 by %c16_i32_22 dim 1 : vector<8x256xf32>, i32 -> vector<8x256xf32>
    %73 = arith.mulf %72, %10 : vector<8x256xf32>
    %c15_i32_23 = arith.constant 15 : i32
    %74 = tpu.dynamic_rotate %69 by %c15_i32_23 dim 1 : vector<8x256xf32>, i32 -> vector<8x256xf32>
    %75 = arith.mulf %74, %13 : vector<8x256xf32>
    %c1_i32_24 = arith.constant 1 : i32
    %76 = tpu.dynamic_rotate %69 by %c1_i32_24 dim 1 : vector<8x256xf32>, i32 -> vector<8x256xf32>
    %77 = arith.mulf %76, %16 : vector<8x256xf32>
    %c255_i32_25 = arith.constant 255 : i32
    %78 = tpu.dynamic_rotate %69 by %c255_i32_25 dim 1 : vector<8x256xf32>, i32 -> vector<8x256xf32>
    %79 = arith.mulf %78, %19 : vector<8x256xf32>
    %c241_i32_26 = arith.constant 241 : i32
    %80 = tpu.dynamic_rotate %69 by %c241_i32_26 dim 1 : vector<8x256xf32>, i32 -> vector<8x256xf32>
    %81 = arith.mulf %80, %22 : vector<8x256xf32>
    %c240_i32_27 = arith.constant 240 : i32
    %82 = tpu.dynamic_rotate %69 by %c240_i32_27 dim 1 : vector<8x256xf32>, i32 -> vector<8x256xf32>
    %83 = arith.mulf %82, %25 : vector<8x256xf32>
    %c239_i32_28 = arith.constant 239 : i32
    %84 = tpu.dynamic_rotate %69 by %c239_i32_28 dim 1 : vector<8x256xf32>, i32 -> vector<8x256xf32>
    %85 = arith.mulf %84, %28 : vector<8x256xf32>
    %86 = tpu.concatenate %71, %73, %75, %77, %69, %79, %81, %83, %85 in 0 : vector<8x256xf32>, vector<8x256xf32>, vector<8x256xf32>, vector<8x256xf32>, vector<8x256xf32>, vector<8x256xf32>, vector<8x256xf32>, vector<8x256xf32>, vector<8x256xf32> -> vector<72x256xf32>
    %c0_29 = arith.constant 0 : index
    %c0_30 = arith.constant 0 : index
    %87 = vector.load %arg6[%c0_29, %c0_30] : memref<8x72xf32, #tpu.memory_space<vmem>>, vector<8x72xf32>
    %cst_31 = arith.constant dense<0.000000e+00> : vector<8x256xf32>
    %88 = tpu.matmul %87, %86, %cst_31 {dimension_numbers = #tpu.dot_dimension_numbers<[1], [0], [0], [1], [0, 0, 1, 1], [], []>} : vector<8x72xf32>, vector<72x256xf32>, vector<8x256xf32> -> vector<8x256xf32>
    %cst_32 = arith.constant 0.000000e+00 : f32
    %89 = vector.broadcast %cst_32 : f32 to vector<8x256xf32>
    %90 = arith.maximumf %88, %89 : vector<8x256xf32>
    %c17_i32_33 = arith.constant 17 : i32
    %91 = tpu.dynamic_rotate %90 by %c17_i32_33 dim 1 : vector<8x256xf32>, i32 -> vector<8x256xf32>
    %92 = arith.mulf %91, %7 : vector<8x256xf32>
    %c16_i32_34 = arith.constant 16 : i32
    %93 = tpu.dynamic_rotate %90 by %c16_i32_34 dim 1 : vector<8x256xf32>, i32 -> vector<8x256xf32>
    %94 = arith.mulf %93, %10 : vector<8x256xf32>
    %c15_i32_35 = arith.constant 15 : i32
    %95 = tpu.dynamic_rotate %90 by %c15_i32_35 dim 1 : vector<8x256xf32>, i32 -> vector<8x256xf32>
    %96 = arith.mulf %95, %13 : vector<8x256xf32>
    %c1_i32_36 = arith.constant 1 : i32
    %97 = tpu.dynamic_rotate %90 by %c1_i32_36 dim 1 : vector<8x256xf32>, i32 -> vector<8x256xf32>
    %98 = arith.mulf %97, %16 : vector<8x256xf32>
    %c255_i32_37 = arith.constant 255 : i32
    %99 = tpu.dynamic_rotate %90 by %c255_i32_37 dim 1 : vector<8x256xf32>, i32 -> vector<8x256xf32>
    %100 = arith.mulf %99, %19 : vector<8x256xf32>
    %c241_i32_38 = arith.constant 241 : i32
    %101 = tpu.dynamic_rotate %90 by %c241_i32_38 dim 1 : vector<8x256xf32>, i32 -> vector<8x256xf32>
    %102 = arith.mulf %101, %22 : vector<8x256xf32>
    %c240_i32_39 = arith.constant 240 : i32
    %103 = tpu.dynamic_rotate %90 by %c240_i32_39 dim 1 : vector<8x256xf32>, i32 -> vector<8x256xf32>
    %104 = arith.mulf %103, %25 : vector<8x256xf32>
    %c239_i32_40 = arith.constant 239 : i32
    %105 = tpu.dynamic_rotate %90 by %c239_i32_40 dim 1 : vector<8x256xf32>, i32 -> vector<8x256xf32>
    %106 = arith.mulf %105, %28 : vector<8x256xf32>
    %107 = tpu.concatenate %92, %94, %96, %98, %90, %100, %102, %104, %106 in 0 : vector<8x256xf32>, vector<8x256xf32>, vector<8x256xf32>, vector<8x256xf32>, vector<8x256xf32>, vector<8x256xf32>, vector<8x256xf32>, vector<8x256xf32>, vector<8x256xf32> -> vector<72x256xf32>
    %c0_41 = arith.constant 0 : index
    %c0_42 = arith.constant 0 : index
    %108 = vector.load %arg7[%c0_41, %c0_42] : memref<8x72xf32, #tpu.memory_space<vmem>>, vector<8x72xf32>
    %cst_43 = arith.constant dense<0.000000e+00> : vector<8x256xf32>
    %109 = tpu.matmul %108, %107, %cst_43 {dimension_numbers = #tpu.dot_dimension_numbers<[1], [0], [0], [1], [0, 0, 1, 1], [], []>} : vector<8x72xf32>, vector<72x256xf32>, vector<8x256xf32> -> vector<8x256xf32>
    %110 = arith.addf %2, %109 : vector<8x256xf32>
    %c17_i32_44 = arith.constant 17 : i32
    %111 = tpu.dynamic_rotate %110 by %c17_i32_44 dim 1 : vector<8x256xf32>, i32 -> vector<8x256xf32>
    %112 = arith.mulf %111, %7 : vector<8x256xf32>
    %c16_i32_45 = arith.constant 16 : i32
    %113 = tpu.dynamic_rotate %110 by %c16_i32_45 dim 1 : vector<8x256xf32>, i32 -> vector<8x256xf32>
    %114 = arith.mulf %113, %10 : vector<8x256xf32>
    %c15_i32_46 = arith.constant 15 : i32
    %115 = tpu.dynamic_rotate %110 by %c15_i32_46 dim 1 : vector<8x256xf32>, i32 -> vector<8x256xf32>
    %116 = arith.mulf %115, %13 : vector<8x256xf32>
    %c1_i32_47 = arith.constant 1 : i32
    %117 = tpu.dynamic_rotate %110 by %c1_i32_47 dim 1 : vector<8x256xf32>, i32 -> vector<8x256xf32>
    %118 = arith.mulf %117, %16 : vector<8x256xf32>
    %c255_i32_48 = arith.constant 255 : i32
    %119 = tpu.dynamic_rotate %110 by %c255_i32_48 dim 1 : vector<8x256xf32>, i32 -> vector<8x256xf32>
    %120 = arith.mulf %119, %19 : vector<8x256xf32>
    %c241_i32_49 = arith.constant 241 : i32
    %121 = tpu.dynamic_rotate %110 by %c241_i32_49 dim 1 : vector<8x256xf32>, i32 -> vector<8x256xf32>
    %122 = arith.mulf %121, %22 : vector<8x256xf32>
    %c240_i32_50 = arith.constant 240 : i32
    %123 = tpu.dynamic_rotate %110 by %c240_i32_50 dim 1 : vector<8x256xf32>, i32 -> vector<8x256xf32>
    %124 = arith.mulf %123, %25 : vector<8x256xf32>
    %c239_i32_51 = arith.constant 239 : i32
    %125 = tpu.dynamic_rotate %110 by %c239_i32_51 dim 1 : vector<8x256xf32>, i32 -> vector<8x256xf32>
    %126 = arith.mulf %125, %28 : vector<8x256xf32>
    %127 = tpu.concatenate %112, %114, %116, %118, %110, %120, %122, %124, %126 in 0 : vector<8x256xf32>, vector<8x256xf32>, vector<8x256xf32>, vector<8x256xf32>, vector<8x256xf32>, vector<8x256xf32>, vector<8x256xf32>, vector<8x256xf32>, vector<8x256xf32> -> vector<72x256xf32>
    %c0_52 = arith.constant 0 : index
    %c0_53 = arith.constant 0 : index
    %128 = vector.load %arg8[%c0_52, %c0_53] : memref<8x72xf32, #tpu.memory_space<vmem>>, vector<8x72xf32>
    %cst_54 = arith.constant dense<0.000000e+00> : vector<8x256xf32>
    %129 = tpu.matmul %128, %127, %cst_54 {dimension_numbers = #tpu.dot_dimension_numbers<[1], [0], [0], [1], [0, 0, 1, 1], [], []>} : vector<8x72xf32>, vector<72x256xf32>, vector<8x256xf32> -> vector<8x256xf32>
    %cst_55 = arith.constant 0.000000e+00 : f32
    %130 = vector.broadcast %cst_55 : f32 to vector<8x256xf32>
    %131 = arith.maximumf %129, %130 : vector<8x256xf32>
    %c17_i32_56 = arith.constant 17 : i32
    %132 = tpu.dynamic_rotate %131 by %c17_i32_56 dim 1 : vector<8x256xf32>, i32 -> vector<8x256xf32>
    %133 = arith.mulf %132, %7 : vector<8x256xf32>
    %c16_i32_57 = arith.constant 16 : i32
    %134 = tpu.dynamic_rotate %131 by %c16_i32_57 dim 1 : vector<8x256xf32>, i32 -> vector<8x256xf32>
    %135 = arith.mulf %134, %10 : vector<8x256xf32>
    %c15_i32_58 = arith.constant 15 : i32
    %136 = tpu.dynamic_rotate %131 by %c15_i32_58 dim 1 : vector<8x256xf32>, i32 -> vector<8x256xf32>
    %137 = arith.mulf %136, %13 : vector<8x256xf32>
    %c1_i32_59 = arith.constant 1 : i32
    %138 = tpu.dynamic_rotate %131 by %c1_i32_59 dim 1 : vector<8x256xf32>, i32 -> vector<8x256xf32>
    %139 = arith.mulf %138, %16 : vector<8x256xf32>
    %c255_i32_60 = arith.constant 255 : i32
    %140 = tpu.dynamic_rotate %131 by %c255_i32_60 dim 1 : vector<8x256xf32>, i32 -> vector<8x256xf32>
    %141 = arith.mulf %140, %19 : vector<8x256xf32>
    %c241_i32_61 = arith.constant 241 : i32
    %142 = tpu.dynamic_rotate %131 by %c241_i32_61 dim 1 : vector<8x256xf32>, i32 -> vector<8x256xf32>
    %143 = arith.mulf %142, %22 : vector<8x256xf32>
    %c240_i32_62 = arith.constant 240 : i32
    %144 = tpu.dynamic_rotate %131 by %c240_i32_62 dim 1 : vector<8x256xf32>, i32 -> vector<8x256xf32>
    %145 = arith.mulf %144, %25 : vector<8x256xf32>
    %c239_i32_63 = arith.constant 239 : i32
    %146 = tpu.dynamic_rotate %131 by %c239_i32_63 dim 1 : vector<8x256xf32>, i32 -> vector<8x256xf32>
    %147 = arith.mulf %146, %28 : vector<8x256xf32>
    %148 = tpu.concatenate %133, %135, %137, %139, %131, %141, %143, %145, %147 in 0 : vector<8x256xf32>, vector<8x256xf32>, vector<8x256xf32>, vector<8x256xf32>, vector<8x256xf32>, vector<8x256xf32>, vector<8x256xf32>, vector<8x256xf32>, vector<8x256xf32> -> vector<72x256xf32>
    %c0_64 = arith.constant 0 : index
    %c0_65 = arith.constant 0 : index
    %149 = vector.load %arg9[%c0_64, %c0_65] : memref<8x72xf32, #tpu.memory_space<vmem>>, vector<8x72xf32>
    %cst_66 = arith.constant dense<0.000000e+00> : vector<8x256xf32>
    %150 = tpu.matmul %149, %148, %cst_66 {dimension_numbers = #tpu.dot_dimension_numbers<[1], [0], [0], [1], [0, 0, 1, 1], [], []>} : vector<8x72xf32>, vector<72x256xf32>, vector<8x256xf32> -> vector<8x256xf32>
    %c0_67 = arith.constant 0 : index
    %c0_68 = arith.constant 0 : index
    %c0_69 = arith.constant 0 : index
    %151 = vector.load %arg10[%c0_67, %c0_68, %c0_69] : memref<1x8x256xf32, #tpu.memory_space<vmem>>, vector<1x8x256xf32>
    %152 = vector.shape_cast %151 : vector<1x8x256xf32> to vector<8x256xf32>
    %153 = vector.shape_cast %150 : vector<8x256xf32> to vector<1x8x256xf32>
    tpu.vector_store %arg10[%c0_67, %c0_68, %c0_69], %153 {strides = array<i32>} : memref<1x8x256xf32, #tpu.memory_space<vmem>>, vector<1x8x256xf32>,
    return
  }
  func.func @transform_0(%arg0: i32) -> (i32, i32, i32) {
    %c0_i32 = arith.constant 0 : i32
    %c0_i32_0 = arith.constant 0 : i32
    %c0_i32_1 = arith.constant 0 : i32
    return %arg0, %c0_i32, %c0_i32_0 : i32, i32, i32
  }
  func.func @transform_1(%arg0: i32) -> (i32, i32, i32) {
    %c0_i32 = arith.constant 0 : i32
    %c0_i32_0 = arith.constant 0 : i32
    %c0_i32_1 = arith.constant 0 : i32
    return %arg0, %c0_i32, %c0_i32_0 : i32, i32, i32
  }
  func.func @transform_2(%arg0: i32) -> (i32, i32) {
    %c0_i32 = arith.constant 0 : i32
    %c0_i32_0 = arith.constant 0 : i32
    %c0_i32_1 = arith.constant 0 : i32
    return %c0_i32, %c0_i32_0 : i32, i32
  }
  func.func @transform_3(%arg0: i32) -> (i32, i32) {
    %c0_i32 = arith.constant 0 : i32
    %c0_i32_0 = arith.constant 0 : i32
    %c0_i32_1 = arith.constant 0 : i32
    return %c0_i32, %c0_i32_0 : i32, i32
  }
  func.func @transform_4(%arg0: i32) -> (i32, i32) {
    %c0_i32 = arith.constant 0 : i32
    %c0_i32_0 = arith.constant 0 : i32
    %c0_i32_1 = arith.constant 0 : i32
    return %c0_i32, %c0_i32_0 : i32, i32
  }
  func.func @transform_5(%arg0: i32) -> (i32, i32) {
    %c0_i32 = arith.constant 0 : i32
    %c0_i32_0 = arith.constant 0 : i32
    %c0_i32_1 = arith.constant 0 : i32
    return %c0_i32, %c0_i32_0 : i32, i32
  }
  func.func @transform_6(%arg0: i32) -> (i32, i32) {
    %c0_i32 = arith.constant 0 : i32
    %c0_i32_0 = arith.constant 0 : i32
    %c0_i32_1 = arith.constant 0 : i32
    return %c0_i32, %c0_i32_0 : i32, i32
  }
  func.func @transform_7(%arg0: i32) -> (i32, i32) {
    %c0_i32 = arith.constant 0 : i32
    %c0_i32_0 = arith.constant 0 : i32
    %c0_i32_1 = arith.constant 0 : i32
    return %c0_i32, %c0_i32_0 : i32, i32
  }
  func.func @transform_8(%arg0: i32) -> (i32, i32) {
    %c0_i32 = arith.constant 0 : i32
    %c0_i32_0 = arith.constant 0 : i32
    %c0_i32_1 = arith.constant 0 : i32
    return %c0_i32, %c0_i32_0 : i32, i32
  }
  func.func @transform_9(%arg0: i32) -> (i32, i32, i32) {
    %c0_i32 = arith.constant 0 : i32
    %c0_i32_0 = arith.constant 0 : i32
    %c0_i32_1 = arith.constant 0 : i32
    return %arg0, %c0_i32, %c0_i32_0 : i32, i32, i32
  }
}

</mosaic_0001>

<llo_original>
// kernel: tpu_custom_call.1
$region0: #{tpu_custom_call.1}
  #allocation0 [shape = 'u32[]', space=smem, size = 0x4, offset = 0x4, fixed_abs, tag = 'smem constant byte address 0x4 - core index']
  #allocation1 [shape = 'u32[144,128]{1,0:T(1,128)}', space=vmem, size = 0x12000, scoped, tag = 'internal scratch']
  %s0 = inlined_call_operand.hbm [shape: f32[2,8,256], index: 0, kind: input, shape index: {}]
  %s1 = inlined_call_operand.hbm [shape: f32[2,8,256], index: 1, kind: input, shape index: {}]
  %s2 = inlined_call_operand.hbm [shape: f32[16,256], index: 2, kind: input, shape index: {}]
  %s3 = inlined_call_operand.vmem [shape: f32[8,72], index: 3, kind: input, shape index: {}]
  %s4 = inlined_call_operand.hbm [shape: f32[8,72], index: 4, kind: input, shape index: {}]
  %s5 = inlined_call_operand.vmem [shape: f32[8,72], index: 5, kind: input, shape index: {}]
  %s6 = inlined_call_operand.hbm [shape: f32[8,72], index: 6, kind: input, shape index: {}]
  %s7 = inlined_call_operand.vmem [shape: f32[8,72], index: 7, kind: input, shape index: {}]
  %s8 = inlined_call_operand.hbm [shape: f32[8,72], index: 8, kind: input, shape index: {}]
  %s9 = inlined_call_operand.hbm [shape: f32[2,8,256], index: 9, kind: output, shape index: {}]
  %s10 = sld [smem:[#allocation0]]
  $region93: #{tpu_custom_call.1} parent=0
    _
  %s12 = ssub.s32 1, %s10
  %s13 = scalar_select 0, %s12, %s10
  $region1: #{tpu_custom_call.1} parent=0
    #allocation2 [shape = 'u8[16384]{0}', space=vmem, size = 0x4000, scoped, tag = 'input window, operand 0']
    #allocation3 [shape = 's32[2]{0}', space=sflag, size = 0x8, scoped, tag = 'scoped memory for tpu_custom_call.1']
    #allocation4 [shape = 's32[2]{0}', space=sflag, size = 0x8, scoped, tag = 'scoped memory for tpu_custom_call.1']
    #allocation5 [shape = 'u8[16384]{0}', space=vmem, size = 0x4000, scoped, tag = 'input window, operand 1']
    #allocation6 [shape = 's32[2]{0}', space=sflag, size = 0x8, scoped, tag = 'scoped memory for tpu_custom_call.1']
    #allocation7 [shape = 'u8[16384]{0}', space=vmem, size = 0x4000, scoped, tag = 'input window, operand 2, single buffered']
    #allocation8 [shape = 'u8[4096]{0}', space=vmem, size = 0x1000, scoped, tag = 'input window, operand 4, single buffered']
    #allocation9 [shape = 's32[1]{0}', space=sflag, size = 0x4, scoped, tag = 'scoped memory for tpu_custom_call.1']
    #allocation10 [shape = 'u8[4096]{0}', space=vmem, size = 0x1000, scoped, tag = 'input window, operand 6, single buffered']
    #allocation11 [shape = 'u8[4096]{0}', space=vmem, size = 0x1000, scoped, tag = 'input window, operand 8, single buffered']
    #allocation12 [shape = 's32[1]{0}', space=sflag, size = 0x4, scoped, tag = 'scoped memory for tpu_custom_call.1']
    #allocation13 [shape = 'u8[16384]{0}', space=vmem, size = 0x4000, scoped, tag = 'output window, operand 0']
    %14 = vsyncpa [#allocation3], 0
    %s15 = scalar_lea.sflag [#allocation3], 1
    %16 = vsyncpa %s15, 0
    %17 = vsyncpa [#allocation6], 0
    %s18 = scalar_lea.sflag [#allocation6], 1
    %19 = vsyncpa %s18, 0
    %20 = vsyncpa [#allocation9], 0
    %21 = vsyncpa [#allocation12], 0
    %22 = vsyncpa [#allocation4], 0
    %s23 = scalar_lea.sflag [#allocation4], 1
    %24 = vsyncpa %s23, 0
    loop: start=0, step=1, limit=4
    $region2: #{tpu_custom_call.1} parent=1 // loop_pre_header
      _
    $region3: #{tpu_custom_call.1} parent=1 // loop_header
      %s26 = sphi 0, %s30
      %p27 = scmp.ge.s32.totalorder %s26, 4
      %s36 = sphi 0, %s38
      %s39 = sphi 0, %s36
      %s40 = sphi 0, %s39
      %s56 = sphi 0, %s40
      %s62 = sphi 0, %s64
      %s65 = sphi 0, %s62
      %s66 = sphi 0, %s65
      %s82 = sphi 0, %s66
      %s86 = sphi 0, %s86
      %s88 = sphi 0, %s86
      %s89 = sphi 0, %s88
      %s103 = sphi 0, %s89
      %s107 = sphi 0, %s107
      %s109 = sphi 0, %s107
      %s110 = sphi 0, %s109
      %s124 = sphi 0, %s110
      %s128 = sphi 0, %s128
      %s130 = sphi 0, %s128
      %s131 = sphi 0, %s130
      %s145 = sphi 0, %s131
      %s149 = sphi 0, %s149
      %s151 = sphi 0, %s149
      %s152 = sphi 0, %s151
      %s166 = sphi 0, %s152
      %s170 = sphi 0, %s170
      %s172 = sphi 0, %s170
      %s173 = sphi 0, %s172
      %s187 = sphi 0, %s173
      %s191 = sphi 0, %s191
      %s193 = sphi 0, %s191
      %s194 = sphi 0, %s193
      %s208 = sphi 0, %s194
      %s212 = sphi 0, %s212
      %s214 = sphi 0, %s212
      %s215 = sphi 0, %s214
      %s229 = sphi 0, %s215
      %s235 = sphi 0, %s237
      %s238 = sphi 0, %s235
      %s239 = sphi 0, %s238
      %s255 = sphi 0, %s239
    $region4: #{tpu_custom_call.1} parent=1 // loop_header_branch
      %29 = sbr.rel (%p27) target = $region8
    $region5: #{tpu_custom_call.1} parent=1 // loop_body
      %s31 = ssub.s32 %s26, 1
      %s32 = ssub.s32 %s26, 2
      %s33 = sadd.s32 %s26, 1
      %s34 = ssub.s32 %s26, %s33
      %p35 = scmp.eq.s32.totalorder %s34, 0
      %s37 = sadd.s32 %s36, 1
      %s38 = scalar_select %p35, %s36, %s37
      %p41 = pneg %p35
      %p42 = scmp.eq.s32.totalorder %s26, 1
      %p43 = por %p41, %p42
      %p44 = scmp.ne.s32.totalorder %s36, %s39
      %p45 = scmp.eq.s32.totalorder %s26, 0
      %p46 = por %p44, %p45
      %p47 = scmp.ne.s32.totalorder %s36, %s39
      %p48 = scmp.eq.s32.totalorder %s31, 1
      %p49 = por %p47, %p48
      %p50 = scmp.ne.s32.totalorder %s39, %s40
      %p51 = scmp.eq.s32.totalorder %s31, 0
      %p52 = por %p50, %p51
      %p53 = scmp.ne.s32.totalorder %s39, %s40
      %p54 = scmp.eq.s32.totalorder %s32, 1
      %p55 = por %p53, %p54
      %p57 = scmp.ne.s32.totalorder %s40, %s56
      %p58 = scmp.eq.s32.totalorder %s32, 0
      %p59 = por %p57, %p58
      %s60 = ssub.s32 %s26, %s33
      %p61 = scmp.eq.s32.totalorder %s60, 0
      %s63 = sadd.s32 %s62, 1
      %s64 = scalar_select %p61, %s62, %s63
      %p67 = pneg %p61
      %p68 = scmp.eq.s32.totalorder %s26, 1
      %p69 = por %p67, %p68
      %p70 = scmp.ne.s32.totalorder %s62, %s65
      %p71 = scmp.eq.s32.totalorder %s26, 0
      %p72 = por %p70, %p71
      %p73 = scmp.ne.s32.totalorder %s62, %s65
      %p74 = scmp.eq.s32.totalorder %s31, 1
      %p75 = por %p73, %p74
      %p76 = scmp.ne.s32.totalorder %s65, %s66
      %p77 = scmp.eq.s32.totalorder %s31, 0
      %p78 = por %p76, %p77
      %p79 = scmp.ne.s32.totalorder %s65, %s66
      %p80 = scmp.eq.s32.totalorder %s32, 1
      %p81 = por %p79, %p80
      %p83 = scmp.ne.s32.totalorder %s66, %s82
      %p84 = scmp.eq.s32.totalorder %s32, 0
      %p85 = por %p83, %p84
      %s87 = sadd.s32 %s86, 1
      %p90 = scmp.eq.s32.totalorder %s26, 1
      %p91 = scmp.ne.s32.totalorder %s86, %s88
      %p92 = scmp.eq.s32.totalorder %s26, 0
      %p93 = por %p91, %p92
      %p94 = scmp.ne.s32.totalorder %s86, %s88
      %p95 = scmp.eq.s32.totalorder %s31, 1
      %p96 = por %p94, %p95
      %p97 = scmp.ne.s32.totalorder %s88, %s89
      %p98 = scmp.eq.s32.totalorder %s31, 0
      %p99 = por %p97, %p98
      %p100 = scmp.ne.s32.totalorder %s88, %s89
      %p101 = scmp.eq.s32.totalorder %s32, 1
      %p102 = por %p100, %p101
      %p104 = scmp.ne.s32.totalorder %s89, %s103
      %p105 = scmp.eq.s32.totalorder %s32, 0
      %p106 = por %p104, %p105
      %s108 = sadd.s32 %s107, 1
      %p111 = scmp.eq.s32.totalorder %s26, 1
      %p112 = scmp.ne.s32.totalorder %s107, %s109
      %p113 = scmp.eq.s32.totalorder %s26, 0
      %p114 = por %p112, %p113
      %p115 = scmp.ne.s32.totalorder %s107, %s109
      %p116 = scmp.eq.s32.totalorder %s31, 1
      %p117 = por %p115, %p116
      %p118 = scmp.ne.s32.totalorder %s109, %s110
      %p119 = scmp.eq.s32.totalorder %s31, 0
      %p120 = por %p118, %p119
      %p121 = scmp.ne.s32.totalorder %s109, %s110
      %p122 = scmp.eq.s32.totalorder %s32, 1
      %p123 = por %p121, %p122
      %p125 = scmp.ne.s32.totalorder %s110, %s124
      %p126 = scmp.eq.s32.totalorder %s32, 0
      %p127 = por %p125, %p126
      %s129 = sadd.s32 %s128, 1
      %p132 = scmp.eq.s32.totalorder %s26, 1
      %p133 = scmp.ne.s32.totalorder %s128, %s130
      %p134 = scmp.eq.s32.totalorder %s26, 0
      %p135 = por %p133, %p134
      %p136 = scmp.ne.s32.totalorder %s128, %s130
      %p137 = scmp.eq.s32.totalorder %s31, 1
      %p138 = por %p136, %p137
      %p139 = scmp.ne.s32.totalorder %s130, %s131
      %p140 = scmp.eq.s32.totalorder %s31, 0
      %p141 = por %p139, %p140
      %p142 = scmp.ne.s32.totalorder %s130, %s131
      %p143 = scmp.eq.s32.totalorder %s32, 1
      %p144 = por %p142, %p143
      %p146 = scmp.ne.s32.totalorder %s131, %s145
      %p147 = scmp.eq.s32.totalorder %s32, 0
      %p148 = por %p146, %p147
      %s150 = sadd.s32 %s149, 1
      %p153 = scmp.eq.s32.totalorder %s26, 1
      %p154 = scmp.ne.s32.totalorder %s149, %s151
      %p155 = scmp.eq.s32.totalorder %s26, 0
      %p156 = por %p154, %p155
      %p157 = scmp.ne.s32.totalorder %s149, %s151
      %p158 = scmp.eq.s32.totalorder %s31, 1
      %p159 = por %p157, %p158
      %p160 = scmp.ne.s32.totalorder %s151, %s152
      %p161 = scmp.eq.s32.totalorder %s31, 0
      %p162 = por %p160, %p161
      %p163 = scmp.ne.s32.totalorder %s151, %s152
      %p164 = scmp.eq.s32.totalorder %s32, 1
      %p165 = por %p163, %p164
      %p167 = scmp.ne.s32.totalorder %s152, %s166
      %p168 = scmp.eq.s32.totalorder %s32, 0
      %p169 = por %p167, %p168
      %s171 = sadd.s32 %s170, 1
      %p174 = scmp.eq.s32.totalorder %s26, 1
      %p175 = scmp.ne.s32.totalorder %s170, %s172
      %p176 = scmp.eq.s32.totalorder %s26, 0
      %p177 = por %p175, %p176
      %p178 = scmp.ne.s32.totalorder %s170, %s172
      %p179 = scmp.eq.s32.totalorder %s31, 1
      %p180 = por %p178, %p179
      %p181 = scmp.ne.s32.totalorder %s172, %s173
      %p182 = scmp.eq.s32.totalorder %s31, 0
      %p183 = por %p181, %p182
      %p184 = scmp.ne.s32.totalorder %s172, %s173
      %p185 = scmp.eq.s32.totalorder %s32, 1
      %p186 = por %p184, %p185
      %p188 = scmp.ne.s32.totalorder %s173, %s187
      %p189 = scmp.eq.s32.totalorder %s32, 0
      %p190 = por %p188, %p189
      %s192 = sadd.s32 %s191, 1
      %p195 = scmp.eq.s32.totalorder %s26, 1
      %p196 = scmp.ne.s32.totalorder %s191, %s193
      %p197 = scmp.eq.s32.totalorder %s26, 0
      %p198 = por %p196, %p197
      %p199 = scmp.ne.s32.totalorder %s191, %s193
      %p200 = scmp.eq.s32.totalorder %s31, 1
      %p201 = por %p199, %p200
      %p202 = scmp.ne.s32.totalorder %s193, %s194
      %p203 = scmp.eq.s32.totalorder %s31, 0
      %p204 = por %p202, %p203
      %p205 = scmp.ne.s32.totalorder %s193, %s194
      %p206 = scmp.eq.s32.totalorder %s32, 1
      %p207 = por %p205, %p206
      %p209 = scmp.ne.s32.totalorder %s194, %s208
      %p210 = scmp.eq.s32.totalorder %s32, 0
      %p211 = por %p209, %p210
      %s213 = sadd.s32 %s212, 1
      %p216 = scmp.eq.s32.totalorder %s26, 1
      %p217 = scmp.ne.s32.totalorder %s212, %s214
      %p218 = scmp.eq.s32.totalorder %s26, 0
      %p219 = por %p217, %p218
      %p220 = scmp.ne.s32.totalorder %s212, %s214
      %p221 = scmp.eq.s32.totalorder %s31, 1
      %p222 = por %p220, %p221
      %p223 = scmp.ne.s32.totalorder %s214, %s215
      %p224 = scmp.eq.s32.totalorder %s31, 0
      %p225 = por %p223, %p224
      %p226 = scmp.ne.s32.totalorder %s214, %s215
      %p227 = scmp.eq.s32.totalorder %s32, 1
      %p228 = por %p226, %p227
      %p230 = scmp.ne.s32.totalorder %s215, %s229
      %p231 = scmp.eq.s32.totalorder %s32, 0
      %p232 = por %p230, %p231
      %s233 = ssub.s32 %s26, %s33
      %p234 = scmp.eq.s32.totalorder %s233, 0
      %s236 = sadd.s32 %s235, 1
      %s237 = scalar_select %p234, %s235, %s236
      %p240 = pneg %p234
      %p241 = scmp.eq.s32.totalorder %s26, 1
      %p242 = por %p240, %p241
      %p243 = scmp.ne.s32.totalorder %s235, %s238
      %p244 = scmp.eq.s32.totalorder %s26, 0
      %p245 = por %p243, %p244
      %p246 = scmp.ne.s32.totalorder %s235, %s238
      %p247 = scmp.eq.s32.totalorder %s31, 1
      %p248 = por %p246, %p247
      %p249 = scmp.ne.s32.totalorder %s238, %s239
      %p250 = scmp.eq.s32.totalorder %s31, 0
      %p251 = por %p249, %p250
      %p252 = scmp.ne.s32.totalorder %s238, %s239
      %p253 = scmp.eq.s32.totalorder %s32, 1
      %p254 = por %p252, %p253
      %p256 = scmp.ne.s32.totalorder %s239, %s255
      %p257 = scmp.eq.s32.totalorder %s32, 0
      %p258 = por %p256, %p257
      %p259 = scmp.le.s32.totalorder 1, %s26
      %p260 = scmp.lt.s32.totalorder %s26, 3
      %p261 = pnand %p259, %p260
      %p262 = pneg %p261
      // Predicated region
      $region9: #{tpu_custom_call.1} parent=5 // pred_check
        _
      $region10: #{tpu_custom_call.1} parent=5 // pred_check_branch
        %264 = sbr.rel (%p261) target = $region12
      $region11: #{tpu_custom_call.1} parent=5 // pred_region
        %s265 = ssub.s32 %s26, 1
        // Predicated region
        $region13: #{tpu_custom_call.1} parent=11 // pred_check
          %p266 = pneg %p99
        $region14: #{tpu_custom_call.1} parent=11 // pred_check_branch
          %268 = sbr.rel (%p266) target = $region16
        $region15: #{tpu_custom_call.1} parent=11 // pred_region
          %s270 = ssub.s32 512, 512
          %271 = vsyncadd [#allocation6], %s270
          %s272 = sshll.u32 [#allocation7], 4
          %s273 = int_to_ptr.vmem [resolvable:$true] %s272
          %278 = dma.hbm_to_vmem [thread:$0]  %s2, 512, %s273, [#allocation6], 256, 256, 16
        $region16: #{tpu_custom_call.1} parent=11 // pred_fallthru
          _
        // Predicated region
        $region17: #{tpu_custom_call.1} parent=11 // pred_check
          %p279 = pneg %p120
        $region18: #{tpu_custom_call.1} parent=11 // pred_check_branch
          %281 = sbr.rel (%p279) target = $region20
        $region19: #{tpu_custom_call.1} parent=11 // pred_region
          _
        $region20: #{tpu_custom_call.1} parent=11 // pred_fallthru
          _
        // Predicated region
        $region21: #{tpu_custom_call.1} parent=11 // pred_check
          %p282 = pneg %p141
        $region22: #{tpu_custom_call.1} parent=11 // pred_check_branch
          %284 = sbr.rel (%p282) target = $region24
        $region23: #{tpu_custom_call.1} parent=11 // pred_region
          %s286 = ssub.s32 128, 128
          %287 = vsyncadd [#allocation9], %s286
          %s289 = sshll.u32 [#allocation8], 4
          %s290 = int_to_ptr.vmem [resolvable:$true] %s289
          %292 = dma.hbm_to_vmem [thread:$0]  %s4, 128, %s290, [#allocation9]
        $region24: #{tpu_custom_call.1} parent=11 // pred_fallthru
          _
        // Predicated region
        $region25: #{tpu_custom_call.1} parent=11 // pred_check
          %p293 = pneg %p162
        $region26: #{tpu_custom_call.1} parent=11 // pred_check_branch
          %295 = sbr.rel (%p293) target = $region28
        $region27: #{tpu_custom_call.1} parent=11 // pred_region
          _
        $region28: #{tpu_custom_call.1} parent=11 // pred_fallthru
          _
        // Predicated region
        $region29: #{tpu_custom_call.1} parent=11 // pred_check
          %p296 = pneg %p183
        $region30: #{tpu_custom_call.1} parent=11 // pred_check_branch
          %298 = sbr.rel (%p296) target = $region32
        $region31: #{tpu_custom_call.1} parent=11 // pred_region
          %s300 = ssub.s32 128, 128
          %301 = vsyncadd [#allocation9], %s300
          %s303 = sshll.u32 [#allocation10], 4
          %s304 = int_to_ptr.vmem [resolvable:$true] %s303
          %306 = dma.hbm_to_vmem [thread:$0]  %s6, 128, %s304, [#allocation9]
        $region32: #{tpu_custom_call.1} parent=11 // pred_fallthru
          _
        // Predicated region
        $region33: #{tpu_custom_call.1} parent=11 // pred_check
          %p307 = pneg %p204
        $region34: #{tpu_custom_call.1} parent=11 // pred_check_branch
          %309 = sbr.rel (%p307) target = $region36
        $region35: #{tpu_custom_call.1} parent=11 // pred_region
          _
        $region36: #{tpu_custom_call.1} parent=11 // pred_fallthru
          _
        // Predicated region
        $region37: #{tpu_custom_call.1} parent=11 // pred_check
          %p310 = pneg %p225
        $region38: #{tpu_custom_call.1} parent=11 // pred_check_branch
          %312 = sbr.rel (%p310) target = $region40
        $region39: #{tpu_custom_call.1} parent=11 // pred_region
          %s314 = ssub.s32 128, 128
          %315 = vsyncadd [#allocation12], %s314
          %s317 = sshll.u32 [#allocation11], 4
          %s318 = int_to_ptr.vmem [resolvable:$true] %s317
          %320 = dma.hbm_to_vmem [thread:$0]  %s8, 128, %s318, [#allocation12]
        $region40: #{tpu_custom_call.1} parent=11 // pred_fallthru
          _
      $region12: #{tpu_custom_call.1} parent=5 // pred_fallthru
        _
      %p321 = scmp.lt.s32.totalorder %s26, 2
      // Predicated region
      $region41: #{tpu_custom_call.1} parent=5 // pred_check
        %p322 = pneg %p321
      $region42: #{tpu_custom_call.1} parent=5 // pred_check_branch
        %324 = sbr.rel (%p322) target = $region44
      $region43: #{tpu_custom_call.1} parent=5 // pred_region
        // Predicated region
        $region45: #{tpu_custom_call.1} parent=43 // pred_check
          %p325 = pneg %p46
        $region46: #{tpu_custom_call.1} parent=43 // pred_check_branch
          %327 = sbr.rel (%p325) target = $region48
        $region47: #{tpu_custom_call.1} parent=43 // pred_region
          %s328 = sand.u32 %s36, 1
          %s329 = scalar_lea.sflag [#allocation3], %s328
          %s330 = sand.u32 %s36, 1
          %s331 = smul.addr %s330, 16
          %s332 = scalar_lea.vmem [#allocation2], %s331
          %s334 = ssub.s32 256, 256
          %335 = vsyncadd %s329, %s334
          %s336 = smul.addr %s26, 2
          %s337 = smul.addr %s336, 128
          %s338 = scalar_lea.hbm %s0, %s337
          %s340 = sshll.u32 %s332, 4
          %s341 = int_to_ptr.vmem [resolvable:$true] %s340
          %343 = dma.hbm_to_vmem [thread:$0]  %s338, 256, %s341, %s329
        $region48: #{tpu_custom_call.1} parent=43 // pred_fallthru
          _
        // Predicated region
        $region49: #{tpu_custom_call.1} parent=43 // pred_check
          %p344 = pneg %p72
        $region50: #{tpu_custom_call.1} parent=43 // pred_check_branch
          %346 = sbr.rel (%p344) target = $region52
        $region51: #{tpu_custom_call.1} parent=43 // pred_region
          %s347 = sand.u32 %s26, 1
          %s348 = scalar_lea.sflag [#allocation6], %s347
          %s349 = sand.u32 %s62, 1
          %s350 = smul.addr %s349, 16
          %s351 = scalar_lea.vmem [#allocation5], %s350
          %s353 = ssub.s32 256, 256
          %354 = vsyncadd %s348, %s353
          %s355 = smul.addr %s26, 2
          %s356 = smul.addr %s355, 128
          %s357 = scalar_lea.hbm %s1, %s356
          %s359 = sshll.u32 %s351, 4
          %s360 = int_to_ptr.vmem [resolvable:$true] %s359
          %362 = dma.hbm_to_vmem [thread:$0]  %s357, 256, %s360, %s348
        $region52: #{tpu_custom_call.1} parent=43 // pred_fallthru
          _
      $region44: #{tpu_custom_call.1} parent=5 // pred_fallthru
        _
      %p363 = scmp.le.s32.totalorder 1, %s26
      %p364 = scmp.lt.s32.totalorder %s26, 3
      %p365 = pnand %p363, %p364
      %p366 = pneg %p365
      // Predicated region
      $region53: #{tpu_custom_call.1} parent=5 // pred_check
        _
      $region54: #{tpu_custom_call.1} parent=5 // pred_check_branch
        %368 = sbr.rel (%p365) target = $region56
      $region55: #{tpu_custom_call.1} parent=5 // pred_region
        %s369 = ssub.s32 %s26, 1
        %s370 = sand.u32 %s39, 1
        %s371 = scalar_lea.sflag [#allocation3], %s370
        %s372 = sand.u32 %s39, 1
        %s373 = smul.addr %s372, 16
        %s374 = scalar_lea.vmem [#allocation2], %s373
        // Predicated region
        $region57: #{tpu_custom_call.1} parent=55 // pred_check
          %p375 = pneg %p52
        $region58: #{tpu_custom_call.1} parent=55 // pred_check_branch
          %377 = sbr.rel (%p375) target = $region60
        $region59: #{tpu_custom_call.1} parent=55 // pred_region
          %378 = dma.done %s371, 256
        $region60: #{tpu_custom_call.1} parent=55 // pred_fallthru
          _
        %s379 = sand.u32 %s31, 1
        %s380 = scalar_lea.sflag [#allocation6], %s379
        %s381 = sand.u32 %s65, 1
        %s382 = smul.addr %s381, 16
        %s383 = scalar_lea.vmem [#allocation5], %s382
        // Predicated region
        $region61: #{tpu_custom_call.1} parent=55 // pred_check
          %p384 = pneg %p78
        $region62: #{tpu_custom_call.1} parent=55 // pred_check_branch
          %386 = sbr.rel (%p384) target = $region64
        $region63: #{tpu_custom_call.1} parent=55 // pred_region
          %387 = dma.done %s380, 256
        $region64: #{tpu_custom_call.1} parent=55 // pred_fallthru
          _
        // Predicated region
        $region65: #{tpu_custom_call.1} parent=55 // pred_check
          %p388 = pneg %p99
        $region66: #{tpu_custom_call.1} parent=55 // pred_check_branch
          %390 = sbr.rel (%p388) target = $region68
        $region67: #{tpu_custom_call.1} parent=55 // pred_region
          %391 = dma.done [#allocation6], 512
        $region68: #{tpu_custom_call.1} parent=55 // pred_fallthru
          _
        // Predicated region
        $region69: #{tpu_custom_call.1} parent=55 // pred_check
          %p392 = pneg %p141
        $region70: #{tpu_custom_call.1} parent=55 // pred_check_branch
          %394 = sbr.rel (%p392) target = $region72
        $region71: #{tpu_custom_call.1} parent=55 // pred_region
          %395 = dma.done [#allocation9], 128
        $region72: #{tpu_custom_call.1} parent=55 // pred_fallthru
          _
        // Predicated region
        $region73: #{tpu_custom_call.1} parent=55 // pred_check
          %p396 = pneg %p183
        $region74: #{tpu_custom_call.1} parent=55 // pred_check_branch
          %398 = sbr.rel (%p396) target = $region76
        $region75: #{tpu_custom_call.1} parent=55 // pred_region
          %399 = dma.done [#allocation9], 128
        $region76: #{tpu_custom_call.1} parent=55 // pred_fallthru
          _
        // Predicated region
        $region77: #{tpu_custom_call.1} parent=55 // pred_check
          %p400 = pneg %p225
        $region78: #{tpu_custom_call.1} parent=55 // pred_check_branch
          %402 = sbr.rel (%p400) target = $region80
        $region79: #{tpu_custom_call.1} parent=55 // pred_region
          %403 = dma.done [#allocation12], 128
        $region80: #{tpu_custom_call.1} parent=55 // pred_fallthru
          _
        %s404 = sand.u32 %s39, 1
        %s405 = scalar_lea.sflag [#allocation3], %s404
        %s406 = sand.u32 %s39, 1
        %s407 = smul.addr %s406, 16
        %s408 = scalar_lea.vmem [#allocation2], %s407
        %p409 = pneg %p52
        %p410 = pneg %p49
        %s411 = sand.u32 %s31, 1
        %s412 = scalar_lea.sflag [#allocation6], %s411
        %s413 = sand.u32 %s65, 1
        %s414 = smul.addr %s413, 16
        %s415 = scalar_lea.vmem [#allocation5], %s414
        %p416 = pneg %p78
        %p417 = pneg %p75
        %p418 = pneg %p99
        %p419 = pneg %p96
        %p420 = pneg %p120
        %p421 = pneg %p117
        %p422 = pneg %p141
        %p423 = pneg %p138
        %p424 = pneg %p162
        %p425 = pneg %p159
        %p426 = pneg %p183
        %p427 = pneg %p180
        %p428 = pneg %p204
        %p429 = pneg %p201
        %p430 = pneg %p225
        %p431 = pneg %p222
        %p432 = pneg %p251
        %p433 = pneg %p248
        %s434 = sand.u32 %s238, 1
        %s435 = scalar_lea.sflag [#allocation4], %s434
        %s436 = sand.u32 %s238, 1
        %s437 = smul.addr %s436, 16
        %s438 = scalar_lea.vmem [#allocation13], %s437
        %v439 = vld [vmem:[#allocation7] sm:$0xff]
        %v440 = vld [vmem:[#allocation7 + $0x8] sm:$0xff]
        %v441 = vld [vmem:[#allocation7 + $0x10] sm:$0xff]
        %v442 = vld [vmem:[#allocation7 + $0x18] sm:$0xff]
        %v443 = vld [vmem:[%s374] sm:$0xff]
        %v444 = vld [vmem:[%s374 + $0x8] sm:$0xff]
        %v445 = vld [vmem:[%s383] sm:$0xff]
        %v446 = vld [vmem:[%s383 + $0x8] sm:$0xff]
        %v447 = vlaneseq
        %v448 = vshrl.u32 %v447, 7
        %v449 = vsub.s32 0, %v448
        %v450 = vrot.slane %v439, %v449
        %v451 = vlaneseq
        %v452 = vshrl.u32 %v451, 7
        %v453 = vsub.s32 0, %v452
        %v454 = vrot.slane %v440, %v453
        %v455 = vlaneseq
        %v456 = vshrl.u32 %v455, 7
        %v457 = vsub.s32 1, %v456
        %v458 = vrot.slane %v439, %v457
        %v459 = vlaneseq
        %v460 = vshrl.u32 %v459, 7
        %v461 = vsub.s32 1, %v460
        %v462 = vrot.slane %v440, %v461
        %v463 = vlaneseq
        %v464 = vshrl.u32 %v463, 7
        %v465 = vsub.s32 2, %v464
        %v466 = vrot.slane %v439, %v465
        %v467 = vlaneseq
        %v468 = vshrl.u32 %v467, 7
        %v469 = vsub.s32 2, %v468
        %v470 = vrot.slane %v440, %v469
        %v471 = vlaneseq
        %v472 = vshrl.u32 %v471, 7
        %v473 = vsub.s32 3, %v472
        %v474 = vrot.slane %v439, %v473
        %v475 = vlaneseq
        %v476 = vshrl.u32 %v475, 7
        %v477 = vsub.s32 3, %v476
        %v478 = vrot.slane %v440, %v477
        %v479 = vlaneseq
        %v480 = vshrl.u32 %v479, 7
        %v481 = vsub.s32 5, %v480
        %v482 = vrot.slane %v439, %v481
        %v483 = vlaneseq
        %v484 = vshrl.u32 %v483, 7
        %v485 = vsub.s32 5, %v484
        %v486 = vrot.slane %v440, %v485
        %v487 = vlaneseq
        %v488 = vshrl.u32 %v487, 7
        %v489 = vsub.s32 6, %v488
        %v490 = vrot.slane %v439, %v489
        %v491 = vlaneseq
        %v492 = vshrl.u32 %v491, 7
        %v493 = vsub.s32 6, %v492
        %v494 = vrot.slane %v440, %v493
        %v495 = vlaneseq
        %v496 = vshrl.u32 %v495, 7
        %v497 = vsub.s32 7, %v496
        %v498 = vrot.slane %v439, %v497
        %v499 = vlaneseq
        %v500 = vshrl.u32 %v499, 7
        %v501 = vsub.s32 7, %v500
        %v502 = vrot.slane %v440, %v501
        %v503 = vlaneseq
        %v504 = vshrl.u32 %v503, 7
        %v505 = vsub.s32 0, %v504
        %v506 = vrot.slane %v441, %v505
        %v507 = vlaneseq
        %v508 = vshrl.u32 %v507, 7
        %v509 = vsub.s32 0, %v508
        %v510 = vrot.slane %v442, %v509
        %511 = vrot.lane.b32.xlu0 %v443, 17
        %v512 = vpop.permute.xlu0 %511
        %513 = vrot.lane.b32.xlu0 %v444, 17
        %v514 = vpop.permute.xlu0 %513
        %v515 = vlaneseq
        %v516 = vand.u32 %v515, 127
        %vm517 = vcmp.lt.s32.totalorder %v516, 17
        %v518 = vsel %vm517, %v512, %v514
        %v519 = vsel %vm517, %v514, %v512
        %v520 = vmul.f32 %v519, %v450
        %v521 = vmul.f32 %v518, %v454
        %522 = vrot.lane.b32.xlu0 %v443, 16
        %v523 = vpop.permute.xlu0 %522
        %524 = vrot.lane.b32.xlu0 %v444, 16
        %v525 = vpop.permute.xlu0 %524
        %vm526 = vcmp.lt.s32.totalorder %v516, 16
        %v527 = vsel %vm526, %v523, %v525
        %v528 = vsel %vm526, %v525, %v523
        %v529 = vmul.f32 %v528, %v458
        %v530 = vmul.f32 %v527, %v462
        %531 = vrot.lane.b32.xlu0 %v443, 15
        %v532 = vpop.permute.xlu0 %531
        %533 = vrot.lane.b32.xlu0 %v444, 15
        %v534 = vpop.permute.xlu0 %533
        %vm535 = vcmp.lt.s32.totalorder %v516, 15
        %v536 = vsel %vm535, %v532, %v534
        %v537 = vsel %vm535, %v534, %v532
        %v538 = vmul.f32 %v537, %v466
        %v539 = vmul.f32 %v536, %v470
        %540 = vrot.lane.b32.xlu0 %v443, 1
        %v541 = vpop.permute.xlu0 %540
        %542 = vrot.lane.b32.xlu0 %v444, 1
        %v543 = vpop.permute.xlu0 %542
        %vm544 = vcmp.lt.s32.totalorder %v516, 1
        %v545 = vsel %vm544, %v541, %v543
        %v546 = vsel %vm544, %v543, %v541
        %v547 = vmul.f32 %v546, %v474
        %v548 = vmul.f32 %v545, %v478
        %549 = vrot.lane.b32.xlu0 %v443, 127
        %v550 = vpop.permute.xlu0 %549
        %551 = vrot.lane.b32.xlu0 %v444, 127
        %v552 = vpop.permute.xlu0 %551
        %vm553 = vcmp.lt.s32.totalorder %v516, 127
        %v554 = vsel %vm553, %v550, %v552
        %v555 = vsel %vm553, %v552, %v550
        %v556 = vmul.f32 %v554, %v482
        %v557 = vmul.f32 %v555, %v486
        %558 = vrot.lane.b32.xlu0 %v443, 113
        %v559 = vpop.permute.xlu0 %558
        %560 = vrot.lane.b32.xlu0 %v444, 113
        %v561 = vpop.permute.xlu0 %560
        %vm562 = vcmp.lt.s32.totalorder %v516, 113
        %v563 = vsel %vm562, %v559, %v561
        %v564 = vsel %vm562, %v561, %v559
        %v565 = vmul.f32 %v563, %v490
        %v566 = vmul.f32 %v564, %v494
        %567 = vrot.lane.b32.xlu0 %v443, 112
        %v568 = vpop.permute.xlu0 %567
        %569 = vrot.lane.b32.xlu0 %v444, 112
        %v570 = vpop.permute.xlu0 %569
        %vm571 = vcmp.lt.s32.totalorder %v516, 112
        %v572 = vsel %vm571, %v568, %v570
        %v573 = vsel %vm571, %v570, %v568
        %v574 = vmul.f32 %v572, %v498
        %v575 = vmul.f32 %v573, %v502
        %576 = vrot.lane.b32.xlu0 %v443, 111
        %v577 = vpop.permute.xlu0 %576
        %578 = vrot.lane.b32.xlu0 %v444, 111
        %v579 = vpop.permute.xlu0 %578
        %vm580 = vcmp.lt.s32.totalorder %v516, 111
        %v581 = vsel %vm580, %v577, %v579
        %v582 = vsel %vm580, %v579, %v577
        %v583 = vmul.f32 %v581, %v506
        %v584 = vmul.f32 %v582, %v510
        %v585 = vld [vmem:[%s3] sm:$0xff]
        %vm586 = vcmask 588800
        %v588 = vsel %vm586, %v585, 0
        %590 = vmatprep.subr.mxu0 %v521
        %591 = vmatpush1.msra.mxu0 %v520
        %592 = vmatprep.subr.mxu0 %v530
        %593 = vmatpush1.msra.mxu0 %v529
        %594 = vmatprep.subr.mxu0 %v539
        %595 = vmatpush1.msra.mxu0 %v538
        %596 = vmatprep.subr.mxu0 %v548
        %597 = vmatpush1.msra.mxu0 %v547
        %598 = vmatprep.subr.mxu0 %v444
        %599 = vmatpush1.msra.mxu0 %v443
        %600 = vmatprep.subr.mxu0 %v557
        %601 = vmatpush1.msra.mxu0 %v556
        %602 = vmatprep.subr.mxu0 %v566
        %603 = vmatpush1.msra.mxu0 %v565
        %604 = vmatprep.subr.mxu0 %v575
        %605 = vmatpush1.msra.mxu0 %v574
        %606 = vmatprep.subr.mxu0 %v584
        %607 = vmatpush1.msra.mxu0 %v583
        %608 = vmatprep.subr.mxu0 0.0
        %609 = vmatpush1.msra.mxu0 0.0
        %610 = vmatprep.subr.mxu0 0.0
        %611 = vmatpush1.msra.mxu0 0.0
        %612 = vmatprep.subr.mxu0 0.0
        %613 = vmatpush1.msra.mxu0 0.0
        %614 = vmatprep.subr.mxu0 0.0
        %615 = vmatpush1.msra.mxu0 0.0
        %616 = vmatprep.subr.mxu0 0.0
        %617 = vmatpush1.msra.mxu0 0.0
        %618 = vmatprep.subr.mxu0 0.0
        %619 = vmatpush1.msra.mxu0 0.0
        %620 = vmatprep.subr.mxu0 0.0
        %621 = vmatpush1.msra.mxu0 0.0
        %622 = vmatprep.subr.mxu0 0.0
        %623 = vmatpush1.msra.mxu0 0.0
        %624 = vmatprep.subr.mxu0 0.0
        %625 = vmatpush1.msra.mxu0 0.0
        %626 = vmatprep.subr.mxu0 0.0
        %627 = vmatpush1.msra.mxu0 0.0
        %628 = vmatprep.subr.mxu0 0.0
        %629 = vmatpush1.msra.mxu0 0.0
        %630 = vmatprep.subr.mxu0 0.0
        %631 = vmatpush1.msra.mxu0 0.0
        %632 = vmatprep.subr.mxu0 0.0
        %633 = vmatpush1.msra.mxu0 0.0
        %634 = vmatprep.subr.mxu0 0.0
        %635 = vmatpush1.msra.mxu0 0.0
        %636 = vmatprep.subr.mxu0 0.0
        %637 = vmatpush1.msra.mxu0 0.0
        %638 = vmatprep.subr.mxu0 0.0
        %639 = vmatpush1.msra.mxu0 0.0
        %640 = vmatprep.subr.mxu0 0.0
        %641 = vmatpush1.msra.mxu0 0.0
        %642 = vmatprep.subr.mxu0 0.0
        %643 = vmatpush1.msra.mxu0 0.0
        %644 = vmatprep.subr.mxu0 0.0
        %645 = vmatpush1.msra.mxu0 0.0
        %646 = vmatprep.subr.mxu0 0.0
        %647 = vmatpush1.msra.mxu0 0.0
        %648 = vmatprep.subr.mxu0 0.0
        %649 = vmatpush1.msra.mxu0 0.0
        %650 = vmatprep.subr.mxu0 0.0
        %651 = vmatpush1.msra.mxu0 0.0
        %652 = vmatprep.subr.mxu0 0.0
        %653 = vmatpush1.msra.mxu0 0.0
        %654 = vmatprep.mubr.f32.mxu0 0.0
        %655 = vmatmul.mubr.f32.gmra.mrb[0].mxu0 %v588
        %v656 = vpop.f32.mrb[0].mxu0
        %v657 = vadd.f32 0.0, %v656
        %v658 = vpop.f32.mrb[0].mxu0
        %v659 = vadd.f32 0.0, %v658
        %660 = vdwg.mxu0
        %v661 = vmax.f32 %v657, 0.0
        %v662 = vmax.f32 %v659, 0.0
        %663 = vrot.lane.b32.xlu0 %v661, 17
        %v664 = vpop.permute.xlu0 %663
        %665 = vrot.lane.b32.xlu0 %v662, 17
        %v666 = vpop.permute.xlu0 %665
        %v667 = vsel %vm517, %v664, %v666
        %v668 = vsel %vm517, %v666, %v664
        %v669 = vmul.f32 %v668, %v450
        %v670 = vmul.f32 %v667, %v454
        %671 = vrot.lane.b32.xlu0 %v661, 16
        %v672 = vpop.permute.xlu0 %671
        %673 = vrot.lane.b32.xlu0 %v662, 16
        %v674 = vpop.permute.xlu0 %673
        %v675 = vsel %vm526, %v672, %v674
        %v676 = vsel %vm526, %v674, %v672
        %v677 = vmul.f32 %v676, %v458
        %v678 = vmul.f32 %v675, %v462
        %679 = vrot.lane.b32.xlu0 %v661, 15
        %v680 = vpop.permute.xlu0 %679
        %681 = vrot.lane.b32.xlu0 %v662, 15
        %v682 = vpop.permute.xlu0 %681
        %v683 = vsel %vm535, %v680, %v682
        %v684 = vsel %vm535, %v682, %v680
        %v685 = vmul.f32 %v684, %v466
        %v686 = vmul.f32 %v683, %v470
        %687 = vrot.lane.b32.xlu0 %v661, 1
        %v688 = vpop.permute.xlu0 %687
        %689 = vrot.lane.b32.xlu0 %v662, 1
        %v690 = vpop.permute.xlu0 %689
        %v691 = vsel %vm544, %v688, %v690
        %v692 = vsel %vm544, %v690, %v688
        %v693 = vmul.f32 %v692, %v474
        %v694 = vmul.f32 %v691, %v478
        %695 = vrot.lane.b32.xlu0 %v661, 127
        %v696 = vpop.permute.xlu0 %695
        %697 = vrot.lane.b32.xlu0 %v662, 127
        %v698 = vpop.permute.xlu0 %697
        %v699 = vsel %vm553, %v696, %v698
        %v700 = vsel %vm553, %v698, %v696
        %v701 = vmul.f32 %v699, %v482
        %v702 = vmul.f32 %v700, %v486
        %703 = vrot.lane.b32.xlu0 %v661, 113
        %v704 = vpop.permute.xlu0 %703
        %705 = vrot.lane.b32.xlu0 %v662, 113
        %v706 = vpop.permute.xlu0 %705
        %v707 = vsel %vm562, %v704, %v706
        %v708 = vsel %vm562, %v706, %v704
        %v709 = vmul.f32 %v707, %v490
        %v710 = vmul.f32 %v708, %v494
        %711 = vrot.lane.b32.xlu0 %v661, 112
        %v712 = vpop.permute.xlu0 %711
        %713 = vrot.lane.b32.xlu0 %v662, 112
        %v714 = vpop.permute.xlu0 %713
        %v715 = vsel %vm571, %v712, %v714
        %v716 = vsel %vm571, %v714, %v712
        %v717 = vmul.f32 %v715, %v498
        %v718 = vmul.f32 %v716, %v502
        %719 = vrot.lane.b32.xlu0 %v661, 111
        %v720 = vpop.permute.xlu0 %719
        %721 = vrot.lane.b32.xlu0 %v662, 111
        %v722 = vpop.permute.xlu0 %721
        %v723 = vsel %vm580, %v720, %v722
        %v724 = vsel %vm580, %v722, %v720
        %v725 = vmul.f32 %v723, %v506
        %v726 = vmul.f32 %v724, %v510
        %v727 = vld [vmem:[#allocation8] sm:$0xff]
        %v729 = vsel %vm586, %v727, 0
        %731 = vmatprep.subr.mxu0 %v670
        %732 = vmatpush1.msra.mxu0 %v669
        %733 = vmatprep.subr.mxu0 %v678
        %734 = vmatpush1.msra.mxu0 %v677
        %735 = vmatprep.subr.mxu0 %v686
        %736 = vmatpush1.msra.mxu0 %v685
        %737 = vmatprep.subr.mxu0 %v694
        %738 = vmatpush1.msra.mxu0 %v693
        %739 = vmatprep.subr.mxu0 %v662
        %740 = vmatpush1.msra.mxu0 %v661
        %741 = vmatprep.subr.mxu0 %v702
        %742 = vmatpush1.msra.mxu0 %v701
        %743 = vmatprep.subr.mxu0 %v710
        %744 = vmatpush1.msra.mxu0 %v709
        %745 = vmatprep.subr.mxu0 %v718
        %746 = vmatpush1.msra.mxu0 %v717
        %747 = vmatprep.subr.mxu0 %v726
        %748 = vmatpush1.msra.mxu0 %v725
        %749 = vmatprep.subr.mxu0 0.0
        %750 = vmatpush1.msra.mxu0 0.0
        %751 = vmatprep.subr.mxu0 0.0
        %752 = vmatpush1.msra.mxu0 0.0
        %753 = vmatprep.subr.mxu0 0.0
        %754 = vmatpush1.msra.mxu0 0.0
        %755 = vmatprep.subr.mxu0 0.0
        %756 = vmatpush1.msra.mxu0 0.0
        %757 = vmatprep.subr.mxu0 0.0
        %758 = vmatpush1.msra.mxu0 0.0
        %759 = vmatprep.subr.mxu0 0.0
        %760 = vmatpush1.msra.mxu0 0.0
        %761 = vmatprep.subr.mxu0 0.0
        %762 = vmatpush1.msra.mxu0 0.0
        %763 = vmatprep.subr.mxu0 0.0
        %764 = vmatpush1.msra.mxu0 0.0
        %765 = vmatprep.subr.mxu0 0.0
        %766 = vmatpush1.msra.mxu0 0.0
        %767 = vmatprep.subr.mxu0 0.0
        %768 = vmatpush1.msra.mxu0 0.0
        %769 = vmatprep.subr.mxu0 0.0
        %770 = vmatpush1.msra.mxu0 0.0
        %771 = vmatprep.subr.mxu0 0.0
        %772 = vmatpush1.msra.mxu0 0.0
        %773 = vmatprep.subr.mxu0 0.0
        %774 = vmatpush1.msra.mxu0 0.0
        %775 = vmatprep.subr.mxu0 0.0
        %776 = vmatpush1.msra.mxu0 0.0
        %777 = vmatprep.subr.mxu0 0.0
        %778 = vmatpush1.msra.mxu0 0.0
        %779 = vmatprep.subr.mxu0 0.0
        %780 = vmatpush1.msra.mxu0 0.0
        %781 = vmatprep.subr.mxu0 0.0
        %782 = vmatpush1.msra.mxu0 0.0
        %783 = vmatprep.subr.mxu0 0.0
        %784 = vmatpush1.msra.mxu0 0.0
        %785 = vmatprep.subr.mxu0 0.0
        %786 = vmatpush1.msra.mxu0 0.0
        %787 = vmatprep.subr.mxu0 0.0
        %788 = vmatpush1.msra.mxu0 0.0
        %789 = vmatprep.subr.mxu0 0.0
        %790 = vmatpush1.msra.mxu0 0.0
        %791 = vmatprep.subr.mxu0 0.0
        %792 = vmatpush1.msra.mxu0 0.0
        %793 = vmatprep.subr.mxu0 0.0
        %794 = vmatpush1.msra.mxu0 0.0
        %795 = vmatprep.mubr.f32.mxu0 0.0
        %796 = vmatmul.mubr.f32.gmra.mrb[0].mxu0 %v729
        %v797 = vpop.f32.mrb[0].mxu0
        %v798 = vadd.f32 0.0, %v797
        %v799 = vpop.f32.mrb[0].mxu0
        %v800 = vadd.f32 0.0, %v799
        %801 = vdwg.mxu0
        %v802 = vsub.f32 %v445, %v798
        %v803 = vsub.f32 %v446, %v800
        %804 = vrot.lane.b32.xlu0 %v802, 17
        %v805 = vpop.permute.xlu0 %804
        %806 = vrot.lane.b32.xlu0 %v803, 17
        %v807 = vpop.permute.xlu0 %806
        %v808 = vsel %vm517, %v805, %v807
        %v809 = vsel %vm517, %v807, %v805
        %v810 = vmul.f32 %v809, %v450
        %v811 = vmul.f32 %v808, %v454
        %812 = vrot.lane.b32.xlu0 %v802, 16
        %v813 = vpop.permute.xlu0 %812
        %814 = vrot.lane.b32.xlu0 %v803, 16
        %v815 = vpop.permute.xlu0 %814
        %v816 = vsel %vm526, %v813, %v815
        %v817 = vsel %vm526, %v815, %v813
        %v818 = vmul.f32 %v817, %v458
        %v819 = vmul.f32 %v816, %v462
        %820 = vrot.lane.b32.xlu0 %v802, 15
        %v821 = vpop.permute.xlu0 %820
        %822 = vrot.lane.b32.xlu0 %v803, 15
        %v823 = vpop.permute.xlu0 %822
        %v824 = vsel %vm535, %v821, %v823
        %v825 = vsel %vm535, %v823, %v821
        %v826 = vmul.f32 %v825, %v466
        %v827 = vmul.f32 %v824, %v470
        %828 = vrot.lane.b32.xlu0 %v802, 1
        %v829 = vpop.permute.xlu0 %828
        %830 = vrot.lane.b32.xlu0 %v803, 1
        %v831 = vpop.permute.xlu0 %830
        %v832 = vsel %vm544, %v829, %v831
        %v833 = vsel %vm544, %v831, %v829
        %v834 = vmul.f32 %v833, %v474
        %v835 = vmul.f32 %v832, %v478
        %836 = vrot.lane.b32.xlu0 %v802, 127
        %v837 = vpop.permute.xlu0 %836
        %838 = vrot.lane.b32.xlu0 %v803, 127
        %v839 = vpop.permute.xlu0 %838
        %v840 = vsel %vm553, %v837, %v839
        %v841 = vsel %vm553, %v839, %v837
        %v842 = vmul.f32 %v840, %v482
        %v843 = vmul.f32 %v841, %v486
        %844 = vrot.lane.b32.xlu0 %v802, 113
        %v845 = vpop.permute.xlu0 %844
        %846 = vrot.lane.b32.xlu0 %v803, 113
        %v847 = vpop.permute.xlu0 %846
        %v848 = vsel %vm562, %v845, %v847
        %v849 = vsel %vm562, %v847, %v845
        %v850 = vmul.f32 %v848, %v490
        %v851 = vmul.f32 %v849, %v494
        %852 = vrot.lane.b32.xlu0 %v802, 112
        %v853 = vpop.permute.xlu0 %852
        %854 = vrot.lane.b32.xlu0 %v803, 112
        %v855 = vpop.permute.xlu0 %854
        %v856 = vsel %vm571, %v853, %v855
        %v857 = vsel %vm571, %v855, %v853
        %v858 = vmul.f32 %v856, %v498
        %v859 = vmul.f32 %v857, %v502
        %860 = vrot.lane.b32.xlu0 %v802, 111
        %v861 = vpop.permute.xlu0 %860
        %862 = vrot.lane.b32.xlu0 %v803, 111
        %v863 = vpop.permute.xlu0 %862
        %v864 = vsel %vm580, %v861, %v863
        %v865 = vsel %vm580, %v863, %v861
        %v866 = vmul.f32 %v864, %v506
        %v867 = vmul.f32 %v865, %v510
        %v868 = vld [vmem:[%s5] sm:$0xff]
        %v870 = vsel %vm586, %v868, 0
        %872 = vmatprep.subr.mxu0 %v811
        %873 = vmatpush1.msra.mxu0 %v810
        %874 = vmatprep.subr.mxu0 %v819
        %875 = vmatpush1.msra.mxu0 %v818
        %876 = vmatprep.subr.mxu0 %v827
        %877 = vmatpush1.msra.mxu0 %v826
        %878 = vmatprep.subr.mxu0 %v835
        %879 = vmatpush1.msra.mxu0 %v834
        %880 = vmatprep.subr.mxu0 %v803
        %881 = vmatpush1.msra.mxu0 %v802
        %882 = vmatprep.subr.mxu0 %v843
        %883 = vmatpush1.msra.mxu0 %v842
        %884 = vmatprep.subr.mxu0 %v851
        %885 = vmatpush1.msra.mxu0 %v850
        %886 = vmatprep.subr.mxu0 %v859
        %887 = vmatpush1.msra.mxu0 %v858
        %888 = vmatprep.subr.mxu0 %v867
        %889 = vmatpush1.msra.mxu0 %v866
        %890 = vmatprep.subr.mxu0 0.0
        %891 = vmatpush1.msra.mxu0 0.0
        %892 = vmatprep.subr.mxu0 0.0
        %893 = vmatpush1.msra.mxu0 0.0
        %894 = vmatprep.subr.mxu0 0.0
        %895 = vmatpush1.msra.mxu0 0.0
        %896 = vmatprep.subr.mxu0 0.0
        %897 = vmatpush1.msra.mxu0 0.0
        %898 = vmatprep.subr.mxu0 0.0
        %899 = vmatpush1.msra.mxu0 0.0
        %900 = vmatprep.subr.mxu0 0.0
        %901 = vmatpush1.msra.mxu0 0.0
        %902 = vmatprep.subr.mxu0 0.0
        %903 = vmatpush1.msra.mxu0 0.0
        %904 = vmatprep.subr.mxu0 0.0
        %905 = vmatpush1.msra.mxu0 0.0
        %906 = vmatprep.subr.mxu0 0.0
        %907 = vmatpush1.msra.mxu0 0.0
        %908 = vmatprep.subr.mxu0 0.0
        %909 = vmatpush1.msra.mxu0 0.0
        %910 = vmatprep.subr.mxu0 0.0
        %911 = vmatpush1.msra.mxu0 0.0
        %912 = vmatprep.subr.mxu0 0.0
        %913 = vmatpush1.msra.mxu0 0.0
        %914 = vmatprep.subr.mxu0 0.0
        %915 = vmatpush1.msra.mxu0 0.0
        %916 = vmatprep.subr.mxu0 0.0
        %917 = vmatpush1.msra.mxu0 0.0
        %918 = vmatprep.subr.mxu0 0.0
        %919 = vmatpush1.msra.mxu0 0.0
        %920 = vmatprep.subr.mxu0 0.0
        %921 = vmatpush1.msra.mxu0 0.0
        %922 = vmatprep.subr.mxu0 0.0
        %923 = vmatpush1.msra.mxu0 0.0
        %924 = vmatprep.subr.mxu0 0.0
        %925 = vmatpush1.msra.mxu0 0.0
        %926 = vmatprep.subr.mxu0 0.0
        %927 = vmatpush1.msra.mxu0 0.0
        %928 = vmatprep.subr.mxu0 0.0
        %929 = vmatpush1.msra.mxu0 0.0
        %930 = vmatprep.subr.mxu0 0.0
        %931 = vmatpush1.msra.mxu0 0.0
        %932 = vmatprep.subr.mxu0 0.0
        %933 = vmatpush1.msra.mxu0 0.0
        %934 = vmatprep.subr.mxu0 0.0
        %935 = vmatpush1.msra.mxu0 0.0
        %936 = vmatprep.mubr.f32.mxu0 0.0
        %937 = vmatmul.mubr.f32.gmra.mrb[0].mxu0 %v870
        %v938 = vpop.f32.mrb[0].mxu0
        %v939 = vadd.f32 0.0, %v938
        %v940 = vpop.f32.mrb[0].mxu0
        %v941 = vadd.f32 0.0, %v940
        %942 = vdwg.mxu0
        %v943 = vmax.f32 %v939, 0.0
        %v944 = vmax.f32 %v941, 0.0
        %945 = vrot.lane.b32.xlu0 %v943, 17
        %v946 = vpop.permute.xlu0 %945
        %947 = vrot.lane.b32.xlu0 %v944, 17
        %v948 = vpop.permute.xlu0 %947
        %v949 = vsel %vm517, %v946, %v948
        %v950 = vsel %vm517, %v948, %v946
        %v951 = vmul.f32 %v950, %v450
        %v952 = vmul.f32 %v949, %v454
        %953 = vrot.lane.b32.xlu0 %v943, 16
        %v954 = vpop.permute.xlu0 %953
        %955 = vrot.lane.b32.xlu0 %v944, 16
        %v956 = vpop.permute.xlu0 %955
        %v957 = vsel %vm526, %v954, %v956
        %v958 = vsel %vm526, %v956, %v954
        %v959 = vmul.f32 %v958, %v458
        %v960 = vmul.f32 %v957, %v462
        %961 = vrot.lane.b32.xlu0 %v943, 15
        %v962 = vpop.permute.xlu0 %961
        %963 = vrot.lane.b32.xlu0 %v944, 15
        %v964 = vpop.permute.xlu0 %963
        %v965 = vsel %vm535, %v962, %v964
        %v966 = vsel %vm535, %v964, %v962
        %v967 = vmul.f32 %v966, %v466
        %v968 = vmul.f32 %v965, %v470
        %969 = vrot.lane.b32.xlu0 %v943, 1
        %v970 = vpop.permute.xlu0 %969
        %971 = vrot.lane.b32.xlu0 %v944, 1
        %v972 = vpop.permute.xlu0 %971
        %v973 = vsel %vm544, %v970, %v972
        %v974 = vsel %vm544, %v972, %v970
        %v975 = vmul.f32 %v974, %v474
        %v976 = vmul.f32 %v973, %v478
        %977 = vrot.lane.b32.xlu0 %v943, 127
        %v978 = vpop.permute.xlu0 %977
        %979 = vrot.lane.b32.xlu0 %v944, 127
        %v980 = vpop.permute.xlu0 %979
        %v981 = vsel %vm553, %v978, %v980
        %v982 = vsel %vm553, %v980, %v978
        %v983 = vmul.f32 %v981, %v482
        %v984 = vmul.f32 %v982, %v486
        %985 = vrot.lane.b32.xlu0 %v943, 113
        %v986 = vpop.permute.xlu0 %985
        %987 = vrot.lane.b32.xlu0 %v944, 113
        %v988 = vpop.permute.xlu0 %987
        %v989 = vsel %vm562, %v986, %v988
        %v990 = vsel %vm562, %v988, %v986
        %v991 = vmul.f32 %v989, %v490
        %v992 = vmul.f32 %v990, %v494
        %993 = vrot.lane.b32.xlu0 %v943, 112
        %v994 = vpop.permute.xlu0 %993
        %995 = vrot.lane.b32.xlu0 %v944, 112
        %v996 = vpop.permute.xlu0 %995
        %v997 = vsel %vm571, %v994, %v996
        %v998 = vsel %vm571, %v996, %v994
        %v999 = vmul.f32 %v997, %v498
        %v1000 = vmul.f32 %v998, %v502
        %1001 = vrot.lane.b32.xlu0 %v943, 111
        %v1002 = vpop.permute.xlu0 %1001
        %1003 = vrot.lane.b32.xlu0 %v944, 111
        %v1004 = vpop.permute.xlu0 %1003
        %v1005 = vsel %vm580, %v1002, %v1004
        %v1006 = vsel %vm580, %v1004, %v1002
        %v1007 = vmul.f32 %v1005, %v506
        %v1008 = vmul.f32 %v1006, %v510
        %v1009 = vld [vmem:[#allocation10] sm:$0xff]
        %v1011 = vsel %vm586, %v1009, 0
        %1013 = vmatprep.subr.mxu0 %v952
        %1014 = vmatpush1.msra.mxu0 %v951
        %1015 = vmatprep.subr.mxu0 %v960
        %1016 = vmatpush1.msra.mxu0 %v959
        %1017 = vmatprep.subr.mxu0 %v968
        %1018 = vmatpush1.msra.mxu0 %v967
        %1019 = vmatprep.subr.mxu0 %v976
        %1020 = vmatpush1.msra.mxu0 %v975
        %1021 = vmatprep.subr.mxu0 %v944
        %1022 = vmatpush1.msra.mxu0 %v943
        %1023 = vmatprep.subr.mxu0 %v984
        %1024 = vmatpush1.msra.mxu0 %v983
        %1025 = vmatprep.subr.mxu0 %v992
        %1026 = vmatpush1.msra.mxu0 %v991
        %1027 = vmatprep.subr.mxu0 %v1000
        %1028 = vmatpush1.msra.mxu0 %v999
        %1029 = vmatprep.subr.mxu0 %v1008
        %1030 = vmatpush1.msra.mxu0 %v1007
        %1031 = vmatprep.subr.mxu0 0.0
        %1032 = vmatpush1.msra.mxu0 0.0
        %1033 = vmatprep.subr.mxu0 0.0
        %1034 = vmatpush1.msra.mxu0 0.0
        %1035 = vmatprep.subr.mxu0 0.0
        %1036 = vmatpush1.msra.mxu0 0.0
        %1037 = vmatprep.subr.mxu0 0.0
        %1038 = vmatpush1.msra.mxu0 0.0
        %1039 = vmatprep.subr.mxu0 0.0
        %1040 = vmatpush1.msra.mxu0 0.0
        %1041 = vmatprep.subr.mxu0 0.0
        %1042 = vmatpush1.msra.mxu0 0.0
        %1043 = vmatprep.subr.mxu0 0.0
        %1044 = vmatpush1.msra.mxu0 0.0
        %1045 = vmatprep.subr.mxu0 0.0
        %1046 = vmatpush1.msra.mxu0 0.0
        %1047 = vmatprep.subr.mxu0 0.0
        %1048 = vmatpush1.msra.mxu0 0.0
        %1049 = vmatprep.subr.mxu0 0.0
        %1050 = vmatpush1.msra.mxu0 0.0
        %1051 = vmatprep.subr.mxu0 0.0
        %1052 = vmatpush1.msra.mxu0 0.0
        %1053 = vmatprep.subr.mxu0 0.0
        %1054 = vmatpush1.msra.mxu0 0.0
        %1055 = vmatprep.subr.mxu0 0.0
        %1056 = vmatpush1.msra.mxu0 0.0
        %1057 = vmatprep.subr.mxu0 0.0
        %1058 = vmatpush1.msra.mxu0 0.0
        %1059 = vmatprep.subr.mxu0 0.0
        %1060 = vmatpush1.msra.mxu0 0.0
        %1061 = vmatprep.subr.mxu0 0.0
        %1062 = vmatpush1.msra.mxu0 0.0
        %1063 = vmatprep.subr.mxu0 0.0
        %1064 = vmatpush1.msra.mxu0 0.0
        %1065 = vmatprep.subr.mxu0 0.0
        %1066 = vmatpush1.msra.mxu0 0.0
        %1067 = vmatprep.subr.mxu0 0.0
        %1068 = vmatpush1.msra.mxu0 0.0
        %1069 = vmatprep.subr.mxu0 0.0
        %1070 = vmatpush1.msra.mxu0 0.0
        %1071 = vmatprep.subr.mxu0 0.0
        %1072 = vmatpush1.msra.mxu0 0.0
        %1073 = vmatprep.subr.mxu0 0.0
        %1074 = vmatpush1.msra.mxu0 0.0
        %1075 = vmatprep.subr.mxu0 0.0
        %1076 = vmatpush1.msra.mxu0 0.0
        %1077 = vmatprep.mubr.f32.mxu0 0.0
        %1078 = vmatmul.mubr.f32.gmra.mrb[0].mxu0 %v1011
        %v1079 = vpop.f32.mrb[0].mxu0
        %v1080 = vadd.f32 0.0, %v1079
        %v1081 = vpop.f32.mrb[0].mxu0
        %v1082 = vadd.f32 0.0, %v1081
        %1083 = vdwg.mxu0
        %v1084 = vadd.f32 %v443, %v1080
        %v1085 = vadd.f32 %v444, %v1082
        %1086 = vrot.lane.b32.xlu0 %v1084, 17
        %v1087 = vpop.permute.xlu0 %1086
        %1088 = vrot.lane.b32.xlu0 %v1085, 17
        %v1089 = vpop.permute.xlu0 %1088
        %v1090 = vsel %vm517, %v1087, %v1089
        %v1091 = vsel %vm517, %v1089, %v1087
        %v1092 = vmul.f32 %v1091, %v450
        %v1093 = vmul.f32 %v1090, %v454
        %1094 = vrot.lane.b32.xlu0 %v1084, 16
        %v1095 = vpop.permute.xlu0 %1094
        %1096 = vrot.lane.b32.xlu0 %v1085, 16
        %v1097 = vpop.permute.xlu0 %1096
        %v1098 = vsel %vm526, %v1095, %v1097
        %v1099 = vsel %vm526, %v1097, %v1095
        %v1100 = vmul.f32 %v1099, %v458
        %v1101 = vmul.f32 %v1098, %v462
        %1102 = vrot.lane.b32.xlu0 %v1084, 15
        %v1103 = vpop.permute.xlu0 %1102
        %1104 = vrot.lane.b32.xlu0 %v1085, 15
        %v1105 = vpop.permute.xlu0 %1104
        %v1106 = vsel %vm535, %v1103, %v1105
        %v1107 = vsel %vm535, %v1105, %v1103
        %v1108 = vmul.f32 %v1107, %v466
        %v1109 = vmul.f32 %v1106, %v470
        %1110 = vrot.lane.b32.xlu0 %v1084, 1
        %v1111 = vpop.permute.xlu0 %1110
        %1112 = vrot.lane.b32.xlu0 %v1085, 1
        %v1113 = vpop.permute.xlu0 %1112
        %v1114 = vsel %vm544, %v1111, %v1113
        %v1115 = vsel %vm544, %v1113, %v1111
        %v1116 = vmul.f32 %v1115, %v474
        %v1117 = vmul.f32 %v1114, %v478
        %1118 = vrot.lane.b32.xlu0 %v1084, 127
        %v1119 = vpop.permute.xlu0 %1118
        %1120 = vrot.lane.b32.xlu0 %v1085, 127
        %v1121 = vpop.permute.xlu0 %1120
        %v1122 = vsel %vm553, %v1119, %v1121
        %v1123 = vsel %vm553, %v1121, %v1119
        %v1124 = vmul.f32 %v1122, %v482
        %v1125 = vmul.f32 %v1123, %v486
        %1126 = vrot.lane.b32.xlu0 %v1084, 113
        %v1127 = vpop.permute.xlu0 %1126
        %1128 = vrot.lane.b32.xlu0 %v1085, 113
        %v1129 = vpop.permute.xlu0 %1128
        %v1130 = vsel %vm562, %v1127, %v1129
        %v1131 = vsel %vm562, %v1129, %v1127
        %v1132 = vmul.f32 %v1130, %v490
        %v1133 = vmul.f32 %v1131, %v494
        %1134 = vrot.lane.b32.xlu0 %v1084, 112
        %v1135 = vpop.permute.xlu0 %1134
        %1136 = vrot.lane.b32.xlu0 %v1085, 112
        %v1137 = vpop.permute.xlu0 %1136
        %v1138 = vsel %vm571, %v1135, %v1137
        %v1139 = vsel %vm571, %v1137, %v1135
        %v1140 = vmul.f32 %v1138, %v498
        %v1141 = vmul.f32 %v1139, %v502
        %1142 = vrot.lane.b32.xlu0 %v1084, 111
        %v1143 = vpop.permute.xlu0 %1142
        %1144 = vrot.lane.b32.xlu0 %v1085, 111
        %v1145 = vpop.permute.xlu0 %1144
        %v1146 = vsel %vm580, %v1143, %v1145
        %v1147 = vsel %vm580, %v1145, %v1143
        %v1148 = vmul.f32 %v1146, %v506
        %v1149 = vmul.f32 %v1147, %v510
        %v1150 = vld [vmem:[%s7] sm:$0xff]
        %v1152 = vsel %vm586, %v1150, 0
        %1154 = vmatprep.subr.mxu0 %v1093
        %1155 = vmatpush1.msra.mxu0 %v1092
        %1156 = vmatprep.subr.mxu0 %v1101
        %1157 = vmatpush1.msra.mxu0 %v1100
        %1158 = vmatprep.subr.mxu0 %v1109
        %1159 = vmatpush1.msra.mxu0 %v1108
        %1160 = vmatprep.subr.mxu0 %v1117
        %1161 = vmatpush1.msra.mxu0 %v1116
        %1162 = vmatprep.subr.mxu0 %v1085
        %1163 = vmatpush1.msra.mxu0 %v1084
        %1164 = vmatprep.subr.mxu0 %v1125
        %1165 = vmatpush1.msra.mxu0 %v1124
        %1166 = vmatprep.subr.mxu0 %v1133
        %1167 = vmatpush1.msra.mxu0 %v1132
        %1168 = vmatprep.subr.mxu0 %v1141
        %1169 = vmatpush1.msra.mxu0 %v1140
        %1170 = vmatprep.subr.mxu0 %v1149
        %1171 = vmatpush1.msra.mxu0 %v1148
        %1172 = vmatprep.subr.mxu0 0.0
        %1173 = vmatpush1.msra.mxu0 0.0
        %1174 = vmatprep.subr.mxu0 0.0
        %1175 = vmatpush1.msra.mxu0 0.0
        %1176 = vmatprep.subr.mxu0 0.0
        %1177 = vmatpush1.msra.mxu0 0.0
        %1178 = vmatprep.subr.mxu0 0.0
        %1179 = vmatpush1.msra.mxu0 0.0
        %1180 = vmatprep.subr.mxu0 0.0
        %1181 = vmatpush1.msra.mxu0 0.0
        %1182 = vmatprep.subr.mxu0 0.0
        %1183 = vmatpush1.msra.mxu0 0.0
        %1184 = vmatprep.subr.mxu0 0.0
        %1185 = vmatpush1.msra.mxu0 0.0
        %1186 = vmatprep.subr.mxu0 0.0
        %1187 = vmatpush1.msra.mxu0 0.0
        %1188 = vmatprep.subr.mxu0 0.0
        %1189 = vmatpush1.msra.mxu0 0.0
        %1190 = vmatprep.subr.mxu0 0.0
        %1191 = vmatpush1.msra.mxu0 0.0
        %1192 = vmatprep.subr.mxu0 0.0
        %1193 = vmatpush1.msra.mxu0 0.0
        %1194 = vmatprep.subr.mxu0 0.0
        %1195 = vmatpush1.msra.mxu0 0.0
        %1196 = vmatprep.subr.mxu0 0.0
        %1197 = vmatpush1.msra.mxu0 0.0
        %1198 = vmatprep.subr.mxu0 0.0
        %1199 = vmatpush1.msra.mxu0 0.0
        %1200 = vmatprep.subr.mxu0 0.0
        %1201 = vmatpush1.msra.mxu0 0.0
        %1202 = vmatprep.subr.mxu0 0.0
        %1203 = vmatpush1.msra.mxu0 0.0
        %1204 = vmatprep.subr.mxu0 0.0
        %1205 = vmatpush1.msra.mxu0 0.0
        %1206 = vmatprep.subr.mxu0 0.0
        %1207 = vmatpush1.msra.mxu0 0.0
        %1208 = vmatprep.subr.mxu0 0.0
        %1209 = vmatpush1.msra.mxu0 0.0
        %1210 = vmatprep.subr.mxu0 0.0
        %1211 = vmatpush1.msra.mxu0 0.0
        %1212 = vmatprep.subr.mxu0 0.0
        %1213 = vmatpush1.msra.mxu0 0.0
        %1214 = vmatprep.subr.mxu0 0.0
        %1215 = vmatpush1.msra.mxu0 0.0
        %1216 = vmatprep.subr.mxu0 0.0
        %1217 = vmatpush1.msra.mxu0 0.0
        %1218 = vmatprep.mubr.f32.mxu0 0.0
        %1219 = vmatmul.mubr.f32.gmra.mrb[0].mxu0 %v1152
        %v1220 = vpop.f32.mrb[0].mxu0
        %v1221 = vadd.f32 0.0, %v1220
        %v1222 = vpop.f32.mrb[0].mxu0
        %v1223 = vadd.f32 0.0, %v1222
        %1224 = vdwg.mxu0
        %v1225 = vmax.f32 %v1221, 0.0
        %v1226 = vmax.f32 %v1223, 0.0
        %1227 = vrot.lane.b32.xlu0 %v1225, 17
        %v1228 = vpop.permute.xlu0 %1227
        %1229 = vrot.lane.b32.xlu0 %v1226, 17
        %v1230 = vpop.permute.xlu0 %1229
        %v1231 = vsel %vm517, %v1228, %v1230
        %v1232 = vsel %vm517, %v1230, %v1228
        %v1233 = vmul.f32 %v1232, %v450
        %v1234 = vmul.f32 %v1231, %v454
        %1235 = vrot.lane.b32.xlu0 %v1225, 16
        %v1236 = vpop.permute.xlu0 %1235
        %1237 = vrot.lane.b32.xlu0 %v1226, 16
        %v1238 = vpop.permute.xlu0 %1237
        %v1239 = vsel %vm526, %v1236, %v1238
        %v1240 = vsel %vm526, %v1238, %v1236
        %v1241 = vmul.f32 %v1240, %v458
        %v1242 = vmul.f32 %v1239, %v462
        %1243 = vrot.lane.b32.xlu0 %v1225, 15
        %v1244 = vpop.permute.xlu0 %1243
        %1245 = vrot.lane.b32.xlu0 %v1226, 15
        %v1246 = vpop.permute.xlu0 %1245
        %v1247 = vsel %vm535, %v1244, %v1246
        %v1248 = vsel %vm535, %v1246, %v1244
        %v1249 = vmul.f32 %v1248, %v466
        %v1250 = vmul.f32 %v1247, %v470
        %1251 = vrot.lane.b32.xlu0 %v1225, 1
        %v1252 = vpop.permute.xlu0 %1251
        %1253 = vrot.lane.b32.xlu0 %v1226, 1
        %v1254 = vpop.permute.xlu0 %1253
        %v1255 = vsel %vm544, %v1252, %v1254
        %v1256 = vsel %vm544, %v1254, %v1252
        %v1257 = vmul.f32 %v1256, %v474
        %v1258 = vmul.f32 %v1255, %v478
        %1259 = vrot.lane.b32.xlu0 %v1225, 127
        %v1260 = vpop.permute.xlu0 %1259
        %1261 = vrot.lane.b32.xlu0 %v1226, 127
        %v1262 = vpop.permute.xlu0 %1261
        %v1263 = vsel %vm553, %v1260, %v1262
        %v1264 = vsel %vm553, %v1262, %v1260
        %v1265 = vmul.f32 %v1263, %v482
        %v1266 = vmul.f32 %v1264, %v486
        %1267 = vrot.lane.b32.xlu0 %v1225, 113
        %v1268 = vpop.permute.xlu0 %1267
        %1269 = vrot.lane.b32.xlu0 %v1226, 113
        %v1270 = vpop.permute.xlu0 %1269
        %v1271 = vsel %vm562, %v1268, %v1270
        %v1272 = vsel %vm562, %v1270, %v1268
        %v1273 = vmul.f32 %v1271, %v490
        %v1274 = vmul.f32 %v1272, %v494
        %1275 = vrot.lane.b32.xlu0 %v1225, 112
        %v1276 = vpop.permute.xlu0 %1275
        %1277 = vrot.lane.b32.xlu0 %v1226, 112
        %v1278 = vpop.permute.xlu0 %1277
        %v1279 = vsel %vm571, %v1276, %v1278
        %v1280 = vsel %vm571, %v1278, %v1276
        %v1281 = vmul.f32 %v1279, %v498
        %v1282 = vmul.f32 %v1280, %v502
        %1283 = vrot.lane.b32.xlu0 %v1225, 111
        %v1284 = vpop.permute.xlu0 %1283
        %1285 = vrot.lane.b32.xlu0 %v1226, 111
        %v1286 = vpop.permute.xlu0 %1285
        %v1287 = vsel %vm580, %v1284, %v1286
        %v1288 = vsel %vm580, %v1286, %v1284
        %v1289 = vmul.f32 %v1287, %v506
        %v1290 = vmul.f32 %v1288, %v510
        %v1291 = vld [vmem:[#allocation11] sm:$0xff]
        %v1293 = vsel %vm586, %v1291, 0
        %1295 = vmatprep.subr.mxu0 %v1234
        %1296 = vmatpush1.msra.mxu0 %v1233
        %1297 = vmatprep.subr.mxu0 %v1242
        %1298 = vmatpush1.msra.mxu0 %v1241
        %1299 = vmatprep.subr.mxu0 %v1250
        %1300 = vmatpush1.msra.mxu0 %v1249
        %1301 = vmatprep.subr.mxu0 %v1258
        %1302 = vmatpush1.msra.mxu0 %v1257
        %1303 = vmatprep.subr.mxu0 %v1226
        %1304 = vmatpush1.msra.mxu0 %v1225
        %1305 = vmatprep.subr.mxu0 %v1266
        %1306 = vmatpush1.msra.mxu0 %v1265
        %1307 = vmatprep.subr.mxu0 %v1274
        %1308 = vmatpush1.msra.mxu0 %v1273
        %1309 = vmatprep.subr.mxu0 %v1282
        %1310 = vmatpush1.msra.mxu0 %v1281
        %1311 = vmatprep.subr.mxu0 %v1290
        %1312 = vmatpush1.msra.mxu0 %v1289
        %1313 = vmatprep.subr.mxu0 0.0
        %1314 = vmatpush1.msra.mxu0 0.0
        %1315 = vmatprep.subr.mxu0 0.0
        %1316 = vmatpush1.msra.mxu0 0.0
        %1317 = vmatprep.subr.mxu0 0.0
        %1318 = vmatpush1.msra.mxu0 0.0
        %1319 = vmatprep.subr.mxu0 0.0
        %1320 = vmatpush1.msra.mxu0 0.0
        %1321 = vmatprep.subr.mxu0 0.0
        %1322 = vmatpush1.msra.mxu0 0.0
        %1323 = vmatprep.subr.mxu0 0.0
        %1324 = vmatpush1.msra.mxu0 0.0
        %1325 = vmatprep.subr.mxu0 0.0
        %1326 = vmatpush1.msra.mxu0 0.0
        %1327 = vmatprep.subr.mxu0 0.0
        %1328 = vmatpush1.msra.mxu0 0.0
        %1329 = vmatprep.subr.mxu0 0.0
        %1330 = vmatpush1.msra.mxu0 0.0
        %1331 = vmatprep.subr.mxu0 0.0
        %1332 = vmatpush1.msra.mxu0 0.0
        %1333 = vmatprep.subr.mxu0 0.0
        %1334 = vmatpush1.msra.mxu0 0.0
        %1335 = vmatprep.subr.mxu0 0.0
        %1336 = vmatpush1.msra.mxu0 0.0
        %1337 = vmatprep.subr.mxu0 0.0
        %1338 = vmatpush1.msra.mxu0 0.0
        %1339 = vmatprep.subr.mxu0 0.0
        %1340 = vmatpush1.msra.mxu0 0.0
        %1341 = vmatprep.subr.mxu0 0.0
        %1342 = vmatpush1.msra.mxu0 0.0
        %1343 = vmatprep.subr.mxu0 0.0
        %1344 = vmatpush1.msra.mxu0 0.0
        %1345 = vmatprep.subr.mxu0 0.0
        %1346 = vmatpush1.msra.mxu0 0.0
        %1347 = vmatprep.subr.mxu0 0.0
        %1348 = vmatpush1.msra.mxu0 0.0
        %1349 = vmatprep.subr.mxu0 0.0
        %1350 = vmatpush1.msra.mxu0 0.0
        %1351 = vmatprep.subr.mxu0 0.0
        %1352 = vmatpush1.msra.mxu0 0.0
        %1353 = vmatprep.subr.mxu0 0.0
        %1354 = vmatpush1.msra.mxu0 0.0
        %1355 = vmatprep.subr.mxu0 0.0
        %1356 = vmatpush1.msra.mxu0 0.0
        %1357 = vmatprep.subr.mxu0 0.0
        %1358 = vmatpush1.msra.mxu0 0.0
        %1359 = vmatprep.mubr.f32.mxu0 0.0
        %1360 = vmatmul.mubr.f32.gmra.mrb[0].mxu0 %v1293
        %v1361 = vpop.f32.mrb[0].mxu0
        %v1362 = vadd.f32 0.0, %v1361
        %v1363 = vpop.f32.mrb[0].mxu0
        %v1364 = vadd.f32 0.0, %v1363
        %1365 = vdwg.mxu0
        %1366 = vst [vmem:[%s438] sm:$0xff] %v1362
        %1367 = vst [vmem:[%s438 + $0x8] sm:$0xff] %v1364
        %s1368 = sand.u32 %s238, 1
        %s1369 = scalar_lea.sflag [#allocation4], %s1368
        %s1370 = sand.u32 %s238, 1
        %s1371 = smul.addr %s1370, 16
        %s1372 = scalar_lea.vmem [#allocation13], %s1371
        // Predicated region
        $region81: #{tpu_custom_call.1} parent=55 // pred_check
          %p1373 = pneg %p248
        $region82: #{tpu_custom_call.1} parent=55 // pred_check_branch
          %1375 = sbr.rel (%p1373) target = $region84
        $region83: #{tpu_custom_call.1} parent=55 // pred_region
          %s1377 = ssub.s32 256, 256
          %1378 = vsyncadd %s1369, %s1377
          %s1379 = smul.addr %s31, 2
          %s1380 = smul.addr %s1379, 128
          %s1381 = scalar_lea.hbm %s9, %s1380
          %s1383 = sshll.u32 %s1372, 4
          %s1384 = int_to_ptr.vmem [resolvable:$true] %s1383
          %1386 = dma.vmem_to_hbm [thread:$0]  %s1384, 256, %s1381, %s1369
        $region84: #{tpu_custom_call.1} parent=55 // pred_fallthru
          _
      $region56: #{tpu_custom_call.1} parent=5 // pred_fallthru
        _
      %p1387 = scmp.le.s32.totalorder 2, %s26
      // Predicated region
      $region85: #{tpu_custom_call.1} parent=5 // pred_check
        %p1388 = pneg %p1387
      $region86: #{tpu_custom_call.1} parent=5 // pred_check_branch
        %1390 = sbr.rel (%p1388) target = $region88
      $region87: #{tpu_custom_call.1} parent=5 // pred_region
        %s1391 = ssub.s32 %s26, 2
        // Predicated region
        $region89: #{tpu_custom_call.1} parent=87 // pred_check
          %p1392 = pneg %p254
        $region90: #{tpu_custom_call.1} parent=87 // pred_check_branch
          %1394 = sbr.rel (%p1392) target = $region92
        $region91: #{tpu_custom_call.1} parent=87 // pred_region
          %s1395 = sand.u32 %s239, 1
          %s1396 = scalar_lea.sflag [#allocation4], %s1395
          %s1397 = sand.u32 %s239, 1
          %s1398 = smul.addr %s1397, 16
          %s1399 = scalar_lea.vmem [#allocation13], %s1398
          %1400 = dma.done %s1396, 256
        $region92: #{tpu_custom_call.1} parent=87 // pred_fallthru
          _
      $region88: #{tpu_custom_call.1} parent=5 // pred_fallthru
        _
    $region6: #{tpu_custom_call.1} parent=1 // loop_footer
      %s30 = sadd.s32 1, %s26
    $region7: #{tpu_custom_call.1} parent=1 // loop_footer_branch
      %25 = sbr.rel target = $region3
    $region8: #{tpu_custom_call.1} parent=1 // loop_exit
      _
    %1401 = vsyncpa [#allocation3], 1
    %s1402 = scalar_lea.sflag [#allocation3], 1
    %1403 = vsyncpa %s1402, 1
    %1404 = vsyncpa [#allocation6], 1
    %s1405 = scalar_lea.sflag [#allocation6], 1
    %1406 = vsyncpa %s1405, 1
    %1407 = vsyncpa [#allocation9], 1
    %1408 = vsyncpa [#allocation12], 1
    %1409 = vsyncpa [#allocation4], 1
    %s1410 = scalar_lea.sflag [#allocation4], 1
    %1411 = vsyncpa %s1410, 1

</llo_original>
